<compile_context>
chip_gen: v5e
topology: v5e:2x2
jax: 0.10.0
libtpu: 0.0.40
codegen_flags: <defaults>
</compile_context>

<pallas_src>
import functools

import jax
import jax.numpy as jnp
from jax.experimental import pallas as pl
from jax.experimental.pallas import tpu as pltpu


# ---------------------------------------------------------------------------
# Fused Pallas kernel
# ---------------------------------------------------------------------------
def _make_fused_lstm_kernel(T, Bp, H, layer_dim):
    """Build a kernel closure with all sizes static.

    Ref layout (positional):
      refs[0]                          : x        (T*Bp, D)  time-major, batch padded
      refs[1 + 3*l : 4 + 3*l]          : layer l  (w_ih_cat (in,8H) bf16,
                                                   w_hh_bd  (2H,8H) bf16,
                                                   b_cat    (1, 8H) f32)
      refs[1 + 3*L]                    : fc_w     (2H, O) bf16
      refs[2 + 3*L]                    : fc_b     (1, O)  f32
      refs[3 + 3*L]                    : out      (Bp, O)
      refs[4 + 3*L]                    : gx VMEM scratch (T*Bp, 8H) f32
    """
    n_in = 1 + 3 * layer_dim + 2
    H2, H4, H6, H8 = 2 * H, 4 * H, 6 * H, 8 * H

    def kernel(*refs):
        x_ref = refs[0]
        fc_w_ref = refs[1 + 3 * layer_dim]
        fc_b_ref = refs[2 + 3 * layer_dim]
        out_ref = refs[n_in]
        gx_ref = refs[n_in + 1]

        # Lane masks (built once).  Gate-major fused layout: within every 2H
        # gate block, lanes [0:H) belong to the forward chain, [H:2H) backward.
        lane8 = jax.lax.broadcasted_iota(jnp.int32, (Bp, H8), 1)
        fwd_gate_mask = (lane8 % H2) < H          # (Bp, 8H): True -> forward column
        lane2 = jax.lax.broadcasted_iota(jnp.int32, (Bp, H2), 1)
        fwd_dir_mask = lane2 < H                  # (Bp, 2H): True -> forward half

        src = x_ref[...].astype(jnp.float32)      # (T*Bp, in_sz) time-major
        last = None

        for layer in range(layer_dim):
            w_ih_ref = refs[1 + 3 * layer]
            w_hh_ref = refs[2 + 3 * layer]
            b_ref = refs[3 + 3 * layer]

            # Hoisted input projection for BOTH directions: one MXU matmul
            # over all T steps, spilled to VMEM (aligned re-reads per step,
            # bounds vreg pressure, off the serial recurrence path).
            gx = (jnp.dot(src.astype(jnp.bfloat16), w_ih_ref[...],
                          preferred_element_type=jnp.float32)
                  + b_ref[...])                   # (T*Bp, 8H) f32
            gx_ref[...] = gx

            w_hh = w_hh_ref[...]                  # (2H, 8H) bf16, block-diagonal

            h = jnp.zeros((Bp, H2), jnp.float32)  # [h_fwd | h_bwd]
            c = jnp.zeros((Bp, H2), jnp.float32)  # [c_fwd | c_bwd]
            hs = []                               # hs[it] = h after iteration it

            for it in range(T):                   # static unroll (T small)
                # Forward chain is at time `it`; backward chain at `T-1-it`.
                ga = gx_ref[it * Bp:(it + 1) * Bp, :]              # aligned load
                gb = gx_ref[(T - 1 - it) * Bp:(T - it) * Bp, :]    # aligned load
                g = jnp.where(fwd_gate_mask, ga, gb) + jnp.dot(
                    h.astype(jnp.bfloat16), w_hh,
                    preferred_element_type=jnp.float32)            # (Bp, 8H)

                i_c = jax.nn.sigmoid(g[:, 0:H2])       # [i_f | i_b]
                f_c = jax.nn.sigmoid(g[:, H2:H4])      # [f_f | f_b]
                g_c = jnp.tanh(g[:, H4:H6])            # [g_f | g_b]
                o_c = jax.nn.sigmoid(g[:, H6:H8])      # [o_f | o_b]

                c = f_c * c + i_c * g_c
                h = o_c * jnp.tanh(c)
                hs.append(h)

            if layer + 1 < layer_dim:
                # Bidirectional concat for the next layer, from registers.
                # Output time t = [h_fwd(t) | h_bwd(t)]; h_fwd(t) sits in the
                # fwd half of hs[t], h_bwd(t) in the bwd half of hs[T-1-t].
                src = jnp.concatenate(
                    [jnp.where(fwd_dir_mask, hs[t], hs[T - 1 - t])
                     for t in range(T)], axis=0)                   # (T*Bp, 2H)
            else:
                # out[:, -1, :] == [h_fwd(T-1) | h_bwd(T-1)], straight from regs.
                last = jnp.where(fwd_dir_mask, hs[T - 1], hs[0])   # (Bp, 2H)

        # Fused final Linear head.
        out = (jnp.dot(last.astype(jnp.bfloat16), fc_w_ref[...],
                       preferred_element_type=jnp.float32)
               + fc_b_ref[...])
        out_ref[...] = out.astype(out_ref.dtype)

    return kernel


# ---------------------------------------------------------------------------
# Fused-weight construction helpers (wrapper-side, one-time XLA ops)
# ---------------------------------------------------------------------------
def _fuse_gate_major(wf, wb, H):
    """Interleave per-gate columns of the two directions: gate-major layout
    [i_f i_b | f_f f_b | g_f g_b | o_f o_b], each block H wide."""
    parts = []
    for g in range(4):
        parts.append(wf[:, g * H:(g + 1) * H])
        parts.append(wb[:, g * H:(g + 1) * H])
    return jnp.concatenate(parts, axis=1)


# ---------------------------------------------------------------------------
# Wrapper: single pallas_call for the whole model
# ---------------------------------------------------------------------------
def lstm_model_forward(x, params, hidden_dim, layer_dim):
    """Equivalent of LSTMModel.forward.  x: (B, T, D) f32 -> (B, output_dim)."""
    B, T, D = x.shape
    H = hidden_dim
    O = params["fc_w"].shape[1]
    Bp = ((B + 7) // 8) * 8          # pad batch to a sublane (8-row) boundary

    # Time-major, batch padded with zeros, flattened: row block [t*Bp:(t+1)*Bp]
    # is the (padded) batch at step t.  Cheap XLA ops outside the kernel.
    x_tm = jnp.transpose(x, (1, 0, 2))                     # (T, B, D)
    x_tm = jnp.pad(x_tm, ((0, 0), (0, Bp - B), (0, 0)))    # (T, Bp, D)
    x_flat = x_tm.reshape(T * Bp, D)

    flat_weights = []
    for layer in range(layer_dim):
        (w_ih_f, w_hh_f, b_f), (w_ih_b, w_hh_b, b_b) = params["lstm"][layer]
        # Input projection for both directions: dense (in_sz, 8H), gate-major.
        w_ih_cat = _fuse_gate_major(w_ih_f, w_ih_b, H).astype(jnp.bfloat16)
        # Hidden projection: block-diagonal (2H, 8H) so [h_f|h_b] @ W does both
        # directions in one MXU pass.
        zeros_h = jnp.zeros_like(w_hh_f)
        w_hh_bd = jnp.concatenate(
            [_fuse_gate_major(w_hh_f, zeros_h, H),
             _fuse_gate_major(zeros_h, w_hh_b, H)], axis=0).astype(jnp.bfloat16)
        b_cat = _fuse_gate_major(b_f, b_b, H)              # (1, 8H) f32
        flat_weights += [w_ih_cat, w_hh_bd, b_cat]

    fc_w = params["fc_w"].astype(jnp.bfloat16)
    fc_b = params["fc_b"]

    n_in = 1 + 3 * layer_dim + 2
    kernel = _make_fused_lstm_kernel(T, Bp, H, layer_dim)

    out_padded = pl.pallas_call(
        kernel,
        out_shape=jax.ShapeDtypeStruct((Bp, O), x.dtype),
        in_specs=[pl.BlockSpec(memory_space=pltpu.MemorySpace.VMEM)] * n_in,
        out_specs=pl.BlockSpec(memory_space=pltpu.MemorySpace.VMEM),
        scratch_shapes=[pltpu.VMEM((T * Bp, 8 * H), jnp.float32)],
        compiler_params=pltpu.CompilerParams(
            vmem_limit_bytes=32 * 1024 * 1024),
    )(x_flat, *flat_weights, fc_w, fc_b)
    return out_padded[:B]


# ---------------------------------------------------------------------------
# Deterministic parameter initialization (PyTorch-style uniform(-k, k))
# ---------------------------------------------------------------------------
def init_params(key, input_dim, hidden_dim, layer_dim, output_dim):
    k = 1.0 / jnp.sqrt(jnp.float32(hidden_dim))

    def uni(key, shape, bound):
        return jax.random.uniform(key, shape, jnp.float32,
                                  minval=-bound, maxval=bound)

    params = {"lstm": []}
    for layer in range(layer_dim):
        in_sz = input_dim if layer == 0 else 2 * hidden_dim
        dirs = []
        for _d in range(2):  # forward, backward
            key, k1, k2, k3, k4 = jax.random.split(key, 5)
            # Stored pre-transposed: (in, 4H) / (H, 4H), gate order [i, f, g, o].
            w_ih = uni(k1, (in_sz, 4 * hidden_dim), k)
            w_hh = uni(k2, (hidden_dim, 4 * hidden_dim), k)
            bias = (uni(k3, (1, 4 * hidden_dim), k)
                    + uni(k4, (1, 4 * hidden_dim), k))      # b_ih + b_hh
            dirs.append((w_ih, w_hh, bias))
        params["lstm"].append(tuple(dirs))

    key, kw, kb = jax.random.split(key, 3)
    kf = 1.0 / jnp.sqrt(jnp.float32(2 * hidden_dim))
    params["fc_w"] = uni(kw, (2 * hidden_dim, output_dim), kf)
    params["fc_b"] = uni(kb, (1, output_dim), kf)
    return params


# ---------------------------------------------------------------------------
# Main
# ---------------------------------------------------------------------------
if __name__ == "__main__":
    INPUT_DIM = 16
    HIDDEN_DIM = 32
    LAYER_DIM = 2
    OUTPUT_DIM = 10
    BATCH = 2
    SEQ = 8

    key = jax.random.PRNGKey(0)
    key, pkey, xkey = jax.random.split(key, 3)

    params = init_params(pkey, INPUT_DIM, HIDDEN_DIM, LAYER_DIM, OUTPUT_DIM)
    x = jax.random.normal(xkey, (BATCH, SEQ, INPUT_DIM), jnp.float32)

    fwd = jax.jit(functools.partial(
        lstm_model_forward, hidden_dim=HIDDEN_DIM, layer_dim=LAYER_DIM))
    out = fwd(x, params)
    out = jax.block_until_ready(out)

    assert out.shape == (BATCH, OUTPUT_DIM), out.shape
    assert jnp.all(jnp.isfinite(out))
    print("KERNEL_OK")
</pallas_src>

<mosaic_0001>
module attributes {stable_mosaic.version = 11 : i64} {
  func.func @kernel(%arg0: memref<64x16xf32, #tpu.memory_space<vmem>>, %arg1: memref<16x256xbf16, #tpu.memory_space<vmem>>, %arg2: memref<64x256xbf16, #tpu.memory_space<vmem>>, %arg3: memref<1x256xf32, #tpu.memory_space<vmem>>, %arg4: memref<64x256xbf16, #tpu.memory_space<vmem>>, %arg5: memref<64x256xbf16, #tpu.memory_space<vmem>>, %arg6: memref<1x256xf32, #tpu.memory_space<vmem>>, %arg7: memref<64x10xbf16, #tpu.memory_space<vmem>>, %arg8: memref<1x10xf32, #tpu.memory_space<vmem>>, %arg9: memref<8x10xf32, #tpu.memory_space<vmem>>, %arg10: memref<64x256xf32, #tpu.memory_space<vmem>>) attributes {dimension_semantics = [], scalar_prefetch = 0 : i64, scratch_operands = 1 : i64, tpu.core_type = #tpu.core_type<tc>} {
    %0 = tpu.iota {dimensions = array<i32: 1>} : vector<8x256xi32>
    %c64_i32 = arith.constant 64 : i32
    %c0_i32 = arith.constant 0 : i32
    %1 = arith.cmpi eq, %c64_i32, %c0_i32 : i32
    %c1_i32 = arith.constant 1 : i32
    %2 = arith.select %1, %c1_i32, %c64_i32 : i32
    %3 = vector.broadcast %2 : i32 to vector<8x256xi32>
    %4 = arith.remsi %0, %3 : vector<8x256xi32>
    %c0_i32_0 = arith.constant 0 : i32
    %5 = vector.broadcast %c0_i32_0 : i32 to vector<8x256xi32>
    %6 = arith.cmpi ne, %4, %5 : vector<8x256xi32>
    %c0_i32_1 = arith.constant 0 : i32
    %7 = vector.broadcast %c0_i32_1 : i32 to vector<8x256xi32>
    %8 = arith.cmpi slt, %4, %7 : vector<8x256xi32>
    %c0_i32_2 = arith.constant 0 : i32
    %9 = arith.cmpi slt, %2, %c0_i32_2 : i32
    %10 = vector.broadcast %9 : i1 to vector<8x256xi1>
    %11 = vector.broadcast %10 : vector<8x256xi1> to vector<8x256xi1>
    %12 = arith.xori %8, %11 : vector<8x256xi1>
    %13 = arith.andi %12, %6 : vector<8x256xi1>
    %14 = vector.broadcast %2 : i32 to vector<8x256xi32>
    %15 = arith.addi %4, %14 : vector<8x256xi32>
    %16 = arith.select %13, %15, %4 : vector<8x256xi1>, vector<8x256xi32>
    %c32_i32 = arith.constant 32 : i32
    %17 = vector.broadcast %c32_i32 : i32 to vector<8x256xi32>
    %18 = arith.cmpi slt, %16, %17 : vector<8x256xi32>
    %19 = tpu.iota {dimensions = array<i32: 1>} : vector<8x64xi32>
    %c32_i32_3 = arith.constant 32 : i32
    %20 = vector.broadcast %c32_i32_3 : i32 to vector<8x64xi32>
    %21 = arith.cmpi slt, %19, %20 : vector<8x64xi32>
    %c0 = arith.constant 0 : index
    %c0_4 = arith.constant 0 : index
    %22 = vector.load %arg0[%c0, %c0_4] : memref<64x16xf32, #tpu.memory_space<vmem>>, vector<64x16xf32>
    %23 = arith.truncf %22 : vector<64x16xf32> to vector<64x16xbf16>
    %c0_5 = arith.constant 0 : index
    %c0_6 = arith.constant 0 : index
    %24 = vector.load %arg1[%c0_5, %c0_6] : memref<16x256xbf16, #tpu.memory_space<vmem>>, vector<16x256xbf16>
    %cst = arith.constant dense<0.000000e+00> : vector<64x256xf32>
    %25 = tpu.matmul %23, %24, %cst {dimension_numbers = #tpu.dot_dimension_numbers<[1], [0], [0], [1], [0, 0, 1, 1], [], []>} : vector<64x16xbf16>, vector<16x256xbf16>, vector<64x256xf32> -> vector<64x256xf32>
    %c0_7 = arith.constant 0 : index
    %c0_8 = arith.constant 0 : index
    %26 = vector.load %arg3[%c0_7, %c0_8] : memref<1x256xf32, #tpu.memory_space<vmem>>, vector<1x256xf32>
    %27 = vector.broadcast %26 : vector<1x256xf32> to vector<64x256xf32>
    %28 = arith.addf %25, %27 : vector<64x256xf32>
    %c0_9 = arith.constant 0 : index
    %c0_10 = arith.constant 0 : index
    %29 = vector.load %arg10[%c0_9, %c0_10] : memref<64x256xf32, #tpu.memory_space<vmem>>, vector<64x256xf32>
    tpu.vector_store %arg10[%c0_9, %c0_10], %28 {strides = array<i32>} : memref<64x256xf32, #tpu.memory_space<vmem>>, vector<64x256xf32>,
    %c0_11 = arith.constant 0 : index
    %c0_12 = arith.constant 0 : index
    %30 = vector.load %arg2[%c0_11, %c0_12] : memref<64x256xbf16, #tpu.memory_space<vmem>>, vector<64x256xbf16>
    %cst_13 = arith.constant 0.000000e+00 : f32
    %31 = vector.broadcast %cst_13 : f32 to vector<8x64xf32>
    %cst_14 = arith.constant 0.000000e+00 : f32
    %32 = vector.broadcast %cst_14 : f32 to vector<8x64xf32>
    %c0_15 = arith.constant 0 : index
    %c0_16 = arith.constant 0 : index
    %33 = vector.load %arg10[%c0_15, %c0_16] : memref<64x256xf32, #tpu.memory_space<vmem>>, vector<8x256xf32>
    %c56 = arith.constant 56 : index
    %c0_17 = arith.constant 0 : index
    %34 = vector.load %arg10[%c56, %c0_17] : memref<64x256xf32, #tpu.memory_space<vmem>>, vector<8x256xf32>
    %35 = arith.select %18, %33, %34 : vector<8x256xi1>, vector<8x256xf32>
    %36 = arith.truncf %31 : vector<8x64xf32> to vector<8x64xbf16>
    %cst_18 = arith.constant dense<0.000000e+00> : vector<8x256xf32>
    %37 = tpu.matmul %36, %30, %cst_18 {dimension_numbers = #tpu.dot_dimension_numbers<[1], [0], [0], [1], [0, 0, 1, 1], [], []>} : vector<8x64xbf16>, vector<64x256xbf16>, vector<8x256xf32> -> vector<8x256xf32>
    %38 = arith.addf %35, %37 : vector<8x256xf32>
    %39 = vector.extract_strided_slice %38 {offsets = [0, 0], sizes = [8, 64], strides = [1, 1]} : vector<8x256xf32> to vector<8x64xf32>
    %40 = arith.negf %39 : vector<8x64xf32>
    %41 = math.exp %40 : vector<8x64xf32>
    %cst_19 = arith.constant 1.000000e+00 : f32
    %42 = vector.broadcast %cst_19 : f32 to vector<8x64xf32>
    %43 = arith.addf %42, %41 : vector<8x64xf32>
    %44 = arith.divf %42, %43 : vector<8x64xf32>
    %45 = vector.extract_strided_slice %38 {offsets = [0, 64], sizes = [8, 64], strides = [1, 1]} : vector<8x256xf32> to vector<8x64xf32>
    %46 = arith.negf %45 : vector<8x64xf32>
    %47 = math.exp %46 : vector<8x64xf32>
    %cst_20 = arith.constant 1.000000e+00 : f32
    %48 = vector.broadcast %cst_20 : f32 to vector<8x64xf32>
    %49 = arith.addf %48, %47 : vector<8x64xf32>
    %50 = arith.divf %48, %49 : vector<8x64xf32>
    %51 = vector.extract_strided_slice %38 {offsets = [0, 128], sizes = [8, 64], strides = [1, 1]} : vector<8x256xf32> to vector<8x64xf32>
    %52 = math.tanh %51 : vector<8x64xf32>
    %53 = vector.extract_strided_slice %38 {offsets = [0, 192], sizes = [8, 64], strides = [1, 1]} : vector<8x256xf32> to vector<8x64xf32>
    %54 = arith.negf %53 : vector<8x64xf32>
    %55 = math.exp %54 : vector<8x64xf32>
    %cst_21 = arith.constant 1.000000e+00 : f32
    %56 = vector.broadcast %cst_21 : f32 to vector<8x64xf32>
    %57 = arith.addf %56, %55 : vector<8x64xf32>
    %58 = arith.divf %56, %57 : vector<8x64xf32>
    %59 = arith.mulf %50, %32 : vector<8x64xf32>
    %60 = arith.mulf %44, %52 : vector<8x64xf32>
    %61 = arith.addf %59, %60 : vector<8x64xf32>
    %62 = math.tanh %61 : vector<8x64xf32>
    %63 = arith.mulf %58, %62 : vector<8x64xf32>
    %c8 = arith.constant 8 : index
    %c0_22 = arith.constant 0 : index
    %64 = vector.load %arg10[%c8, %c0_22] : memref<64x256xf32, #tpu.memory_space<vmem>>, vector<8x256xf32>
    %c48 = arith.constant 48 : index
    %c0_23 = arith.constant 0 : index
    %65 = vector.load %arg10[%c48, %c0_23] : memref<64x256xf32, #tpu.memory_space<vmem>>, vector<8x256xf32>
    %66 = arith.select %18, %64, %65 : vector<8x256xi1>, vector<8x256xf32>
    %67 = arith.truncf %63 : vector<8x64xf32> to vector<8x64xbf16>
    %cst_24 = arith.constant dense<0.000000e+00> : vector<8x256xf32>
    %68 = tpu.matmul %67, %30, %cst_24 {dimension_numbers = #tpu.dot_dimension_numbers<[1], [0], [0], [1], [0, 0, 1, 1], [], []>} : vector<8x64xbf16>, vector<64x256xbf16>, vector<8x256xf32> -> vector<8x256xf32>
    %69 = arith.addf %66, %68 : vector<8x256xf32>
    %70 = vector.extract_strided_slice %69 {offsets = [0, 0], sizes = [8, 64], strides = [1, 1]} : vector<8x256xf32> to vector<8x64xf32>
    %71 = arith.negf %70 : vector<8x64xf32>
    %72 = math.exp %71 : vector<8x64xf32>
    %cst_25 = arith.constant 1.000000e+00 : f32
    %73 = vector.broadcast %cst_25 : f32 to vector<8x64xf32>
    %74 = arith.addf %73, %72 : vector<8x64xf32>
    %75 = arith.divf %73, %74 : vector<8x64xf32>
    %76 = vector.extract_strided_slice %69 {offsets = [0, 64], sizes = [8, 64], strides = [1, 1]} : vector<8x256xf32> to vector<8x64xf32>
    %77 = arith.negf %76 : vector<8x64xf32>
    %78 = math.exp %77 : vector<8x64xf32>
    %cst_26 = arith.constant 1.000000e+00 : f32
    %79 = vector.broadcast %cst_26 : f32 to vector<8x64xf32>
    %80 = arith.addf %79, %78 : vector<8x64xf32>
    %81 = arith.divf %79, %80 : vector<8x64xf32>
    %82 = vector.extract_strided_slice %69 {offsets = [0, 128], sizes = [8, 64], strides = [1, 1]} : vector<8x256xf32> to vector<8x64xf32>
    %83 = math.tanh %82 : vector<8x64xf32>
    %84 = vector.extract_strided_slice %69 {offsets = [0, 192], sizes = [8, 64], strides = [1, 1]} : vector<8x256xf32> to vector<8x64xf32>
    %85 = arith.negf %84 : vector<8x64xf32>
    %86 = math.exp %85 : vector<8x64xf32>
    %cst_27 = arith.constant 1.000000e+00 : f32
    %87 = vector.broadcast %cst_27 : f32 to vector<8x64xf32>
    %88 = arith.addf %87, %86 : vector<8x64xf32>
    %89 = arith.divf %87, %88 : vector<8x64xf32>
    %90 = arith.mulf %81, %61 : vector<8x64xf32>
    %91 = arith.mulf %75, %83 : vector<8x64xf32>
    %92 = arith.addf %90, %91 : vector<8x64xf32>
    %93 = math.tanh %92 : vector<8x64xf32>
    %94 = arith.mulf %89, %93 : vector<8x64xf32>
    %c16 = arith.constant 16 : index
    %c0_28 = arith.constant 0 : index
    %95 = vector.load %arg10[%c16, %c0_28] : memref<64x256xf32, #tpu.memory_space<vmem>>, vector<8x256xf32>
    %c40 = arith.constant 40 : index
    %c0_29 = arith.constant 0 : index
    %96 = vector.load %arg10[%c40, %c0_29] : memref<64x256xf32, #tpu.memory_space<vmem>>, vector<8x256xf32>
    %97 = arith.select %18, %95, %96 : vector<8x256xi1>, vector<8x256xf32>
    %98 = arith.truncf %94 : vector<8x64xf32> to vector<8x64xbf16>
    %cst_30 = arith.constant dense<0.000000e+00> : vector<8x256xf32>
    %99 = tpu.matmul %98, %30, %cst_30 {dimension_numbers = #tpu.dot_dimension_numbers<[1], [0], [0], [1], [0, 0, 1, 1], [], []>} : vector<8x64xbf16>, vector<64x256xbf16>, vector<8x256xf32> -> vector<8x256xf32>
    %100 = arith.addf %97, %99 : vector<8x256xf32>
    %101 = vector.extract_strided_slice %100 {offsets = [0, 0], sizes = [8, 64], strides = [1, 1]} : vector<8x256xf32> to vector<8x64xf32>
    %102 = arith.negf %101 : vector<8x64xf32>
    %103 = math.exp %102 : vector<8x64xf32>
    %cst_31 = arith.constant 1.000000e+00 : f32
    %104 = vector.broadcast %cst_31 : f32 to vector<8x64xf32>
    %105 = arith.addf %104, %103 : vector<8x64xf32>
    %106 = arith.divf %104, %105 : vector<8x64xf32>
    %107 = vector.extract_strided_slice %100 {offsets = [0, 64], sizes = [8, 64], strides = [1, 1]} : vector<8x256xf32> to vector<8x64xf32>
    %108 = arith.negf %107 : vector<8x64xf32>
    %109 = math.exp %108 : vector<8x64xf32>
    %cst_32 = arith.constant 1.000000e+00 : f32
    %110 = vector.broadcast %cst_32 : f32 to vector<8x64xf32>
    %111 = arith.addf %110, %109 : vector<8x64xf32>
    %112 = arith.divf %110, %111 : vector<8x64xf32>
    %113 = vector.extract_strided_slice %100 {offsets = [0, 128], sizes = [8, 64], strides = [1, 1]} : vector<8x256xf32> to vector<8x64xf32>
    %114 = math.tanh %113 : vector<8x64xf32>
    %115 = vector.extract_strided_slice %100 {offsets = [0, 192], sizes = [8, 64], strides = [1, 1]} : vector<8x256xf32> to vector<8x64xf32>
    %116 = arith.negf %115 : vector<8x64xf32>
    %117 = math.exp %116 : vector<8x64xf32>
    %cst_33 = arith.constant 1.000000e+00 : f32
    %118 = vector.broadcast %cst_33 : f32 to vector<8x64xf32>
    %119 = arith.addf %118, %117 : vector<8x64xf32>
    %120 = arith.divf %118, %119 : vector<8x64xf32>
    %121 = arith.mulf %112, %92 : vector<8x64xf32>
    %122 = arith.mulf %106, %114 : vector<8x64xf32>
    %123 = arith.addf %121, %122 : vector<8x64xf32>
    %124 = math.tanh %123 : vector<8x64xf32>
    %125 = arith.mulf %120, %124 : vector<8x64xf32>
    %c24 = arith.constant 24 : index
    %c0_34 = arith.constant 0 : index
    %126 = vector.load %arg10[%c24, %c0_34] : memref<64x256xf32, #tpu.memory_space<vmem>>, vector<8x256xf32>
    %c32 = arith.constant 32 : index
    %c0_35 = arith.constant 0 : index
    %127 = vector.load %arg10[%c32, %c0_35] : memref<64x256xf32, #tpu.memory_space<vmem>>, vector<8x256xf32>
    %128 = arith.select %18, %126, %127 : vector<8x256xi1>, vector<8x256xf32>
    %129 = arith.truncf %125 : vector<8x64xf32> to vector<8x64xbf16>
    %cst_36 = arith.constant dense<0.000000e+00> : vector<8x256xf32>
    %130 = tpu.matmul %129, %30, %cst_36 {dimension_numbers = #tpu.dot_dimension_numbers<[1], [0], [0], [1], [0, 0, 1, 1], [], []>} : vector<8x64xbf16>, vector<64x256xbf16>, vector<8x256xf32> -> vector<8x256xf32>
    %131 = arith.addf %128, %130 : vector<8x256xf32>
    %132 = vector.extract_strided_slice %131 {offsets = [0, 0], sizes = [8, 64], strides = [1, 1]} : vector<8x256xf32> to vector<8x64xf32>
    %133 = arith.negf %132 : vector<8x64xf32>
    %134 = math.exp %133 : vector<8x64xf32>
    %cst_37 = arith.constant 1.000000e+00 : f32
    %135 = vector.broadcast %cst_37 : f32 to vector<8x64xf32>
    %136 = arith.addf %135, %134 : vector<8x64xf32>
    %137 = arith.divf %135, %136 : vector<8x64xf32>
    %138 = vector.extract_strided_slice %131 {offsets = [0, 64], sizes = [8, 64], strides = [1, 1]} : vector<8x256xf32> to vector<8x64xf32>
    %139 = arith.negf %138 : vector<8x64xf32>
    %140 = math.exp %139 : vector<8x64xf32>
    %cst_38 = arith.constant 1.000000e+00 : f32
    %141 = vector.broadcast %cst_38 : f32 to vector<8x64xf32>
    %142 = arith.addf %141, %140 : vector<8x64xf32>
    %143 = arith.divf %141, %142 : vector<8x64xf32>
    %144 = vector.extract_strided_slice %131 {offsets = [0, 128], sizes = [8, 64], strides = [1, 1]} : vector<8x256xf32> to vector<8x64xf32>
    %145 = math.tanh %144 : vector<8x64xf32>
    %146 = vector.extract_strided_slice %131 {offsets = [0, 192], sizes = [8, 64], strides = [1, 1]} : vector<8x256xf32> to vector<8x64xf32>
    %147 = arith.negf %146 : vector<8x64xf32>
    %148 = math.exp %147 : vector<8x64xf32>
    %cst_39 = arith.constant 1.000000e+00 : f32
    %149 = vector.broadcast %cst_39 : f32 to vector<8x64xf32>
    %150 = arith.addf %149, %148 : vector<8x64xf32>
    %151 = arith.divf %149, %150 : vector<8x64xf32>
    %152 = arith.mulf %143, %123 : vector<8x64xf32>
    %153 = arith.mulf %137, %145 : vector<8x64xf32>
    %154 = arith.addf %152, %153 : vector<8x64xf32>
    %155 = math.tanh %154 : vector<8x64xf32>
    %156 = arith.mulf %151, %155 : vector<8x64xf32>
    %c32_40 = arith.constant 32 : index
    %c0_41 = arith.constant 0 : index
    %157 = vector.load %arg10[%c32_40, %c0_41] : memref<64x256xf32, #tpu.memory_space<vmem>>, vector<8x256xf32>
    %c24_42 = arith.constant 24 : index
    %c0_43 = arith.constant 0 : index
    %158 = vector.load %arg10[%c24_42, %c0_43] : memref<64x256xf32, #tpu.memory_space<vmem>>, vector<8x256xf32>
    %159 = arith.select %18, %157, %158 : vector<8x256xi1>, vector<8x256xf32>
    %160 = arith.truncf %156 : vector<8x64xf32> to vector<8x64xbf16>
    %cst_44 = arith.constant dense<0.000000e+00> : vector<8x256xf32>
    %161 = tpu.matmul %160, %30, %cst_44 {dimension_numbers = #tpu.dot_dimension_numbers<[1], [0], [0], [1], [0, 0, 1, 1], [], []>} : vector<8x64xbf16>, vector<64x256xbf16>, vector<8x256xf32> -> vector<8x256xf32>
    %162 = arith.addf %159, %161 : vector<8x256xf32>
    %163 = vector.extract_strided_slice %162 {offsets = [0, 0], sizes = [8, 64], strides = [1, 1]} : vector<8x256xf32> to vector<8x64xf32>
    %164 = arith.negf %163 : vector<8x64xf32>
    %165 = math.exp %164 : vector<8x64xf32>
    %cst_45 = arith.constant 1.000000e+00 : f32
    %166 = vector.broadcast %cst_45 : f32 to vector<8x64xf32>
    %167 = arith.addf %166, %165 : vector<8x64xf32>
    %168 = arith.divf %166, %167 : vector<8x64xf32>
    %169 = vector.extract_strided_slice %162 {offsets = [0, 64], sizes = [8, 64], strides = [1, 1]} : vector<8x256xf32> to vector<8x64xf32>
    %170 = arith.negf %169 : vector<8x64xf32>
    %171 = math.exp %170 : vector<8x64xf32>
    %cst_46 = arith.constant 1.000000e+00 : f32
    %172 = vector.broadcast %cst_46 : f32 to vector<8x64xf32>
    %173 = arith.addf %172, %171 : vector<8x64xf32>
    %174 = arith.divf %172, %173 : vector<8x64xf32>
    %175 = vector.extract_strided_slice %162 {offsets = [0, 128], sizes = [8, 64], strides = [1, 1]} : vector<8x256xf32> to vector<8x64xf32>
    %176 = math.tanh %175 : vector<8x64xf32>
    %177 = vector.extract_strided_slice %162 {offsets = [0, 192], sizes = [8, 64], strides = [1, 1]} : vector<8x256xf32> to vector<8x64xf32>
    %178 = arith.negf %177 : vector<8x64xf32>
    %179 = math.exp %178 : vector<8x64xf32>
    %cst_47 = arith.constant 1.000000e+00 : f32
    %180 = vector.broadcast %cst_47 : f32 to vector<8x64xf32>
    %181 = arith.addf %180, %179 : vector<8x64xf32>
    %182 = arith.divf %180, %181 : vector<8x64xf32>
    %183 = arith.mulf %174, %154 : vector<8x64xf32>
    %184 = arith.mulf %168, %176 : vector<8x64xf32>
    %185 = arith.addf %183, %184 : vector<8x64xf32>
    %186 = math.tanh %185 : vector<8x64xf32>
    %187 = arith.mulf %182, %186 : vector<8x64xf32>
    %c40_48 = arith.constant 40 : index
    %c0_49 = arith.constant 0 : index
    %188 = vector.load %arg10[%c40_48, %c0_49] : memref<64x256xf32, #tpu.memory_space<vmem>>, vector<8x256xf32>
    %c16_50 = arith.constant 16 : index
    %c0_51 = arith.constant 0 : index
    %189 = vector.load %arg10[%c16_50, %c0_51] : memref<64x256xf32, #tpu.memory_space<vmem>>, vector<8x256xf32>
    %190 = arith.select %18, %188, %189 : vector<8x256xi1>, vector<8x256xf32>
    %191 = arith.truncf %187 : vector<8x64xf32> to vector<8x64xbf16>
    %cst_52 = arith.constant dense<0.000000e+00> : vector<8x256xf32>
    %192 = tpu.matmul %191, %30, %cst_52 {dimension_numbers = #tpu.dot_dimension_numbers<[1], [0], [0], [1], [0, 0, 1, 1], [], []>} : vector<8x64xbf16>, vector<64x256xbf16>, vector<8x256xf32> -> vector<8x256xf32>
    %193 = arith.addf %190, %192 : vector<8x256xf32>
    %194 = vector.extract_strided_slice %193 {offsets = [0, 0], sizes = [8, 64], strides = [1, 1]} : vector<8x256xf32> to vector<8x64xf32>
    %195 = arith.negf %194 : vector<8x64xf32>
    %196 = math.exp %195 : vector<8x64xf32>
    %cst_53 = arith.constant 1.000000e+00 : f32
    %197 = vector.broadcast %cst_53 : f32 to vector<8x64xf32>
    %198 = arith.addf %197, %196 : vector<8x64xf32>
    %199 = arith.divf %197, %198 : vector<8x64xf32>
    %200 = vector.extract_strided_slice %193 {offsets = [0, 64], sizes = [8, 64], strides = [1, 1]} : vector<8x256xf32> to vector<8x64xf32>
    %201 = arith.negf %200 : vector<8x64xf32>
    %202 = math.exp %201 : vector<8x64xf32>
    %cst_54 = arith.constant 1.000000e+00 : f32
    %203 = vector.broadcast %cst_54 : f32 to vector<8x64xf32>
    %204 = arith.addf %203, %202 : vector<8x64xf32>
    %205 = arith.divf %203, %204 : vector<8x64xf32>
    %206 = vector.extract_strided_slice %193 {offsets = [0, 128], sizes = [8, 64], strides = [1, 1]} : vector<8x256xf32> to vector<8x64xf32>
    %207 = math.tanh %206 : vector<8x64xf32>
    %208 = vector.extract_strided_slice %193 {offsets = [0, 192], sizes = [8, 64], strides = [1, 1]} : vector<8x256xf32> to vector<8x64xf32>
    %209 = arith.negf %208 : vector<8x64xf32>
    %210 = math.exp %209 : vector<8x64xf32>
    %cst_55 = arith.constant 1.000000e+00 : f32
    %211 = vector.broadcast %cst_55 : f32 to vector<8x64xf32>
    %212 = arith.addf %211, %210 : vector<8x64xf32>
    %213 = arith.divf %211, %212 : vector<8x64xf32>
    %214 = arith.mulf %205, %185 : vector<8x64xf32>
    %215 = arith.mulf %199, %207 : vector<8x64xf32>
    %216 = arith.addf %214, %215 : vector<8x64xf32>
    %217 = math.tanh %216 : vector<8x64xf32>
    %218 = arith.mulf %213, %217 : vector<8x64xf32>
    %c48_56 = arith.constant 48 : index
    %c0_57 = arith.constant 0 : index
    %219 = vector.load %arg10[%c48_56, %c0_57] : memref<64x256xf32, #tpu.memory_space<vmem>>, vector<8x256xf32>
    %c8_58 = arith.constant 8 : index
    %c0_59 = arith.constant 0 : index
    %220 = vector.load %arg10[%c8_58, %c0_59] : memref<64x256xf32, #tpu.memory_space<vmem>>, vector<8x256xf32>
    %221 = arith.select %18, %219, %220 : vector<8x256xi1>, vector<8x256xf32>
    %222 = arith.truncf %218 : vector<8x64xf32> to vector<8x64xbf16>
    %cst_60 = arith.constant dense<0.000000e+00> : vector<8x256xf32>
    %223 = tpu.matmul %222, %30, %cst_60 {dimension_numbers = #tpu.dot_dimension_numbers<[1], [0], [0], [1], [0, 0, 1, 1], [], []>} : vector<8x64xbf16>, vector<64x256xbf16>, vector<8x256xf32> -> vector<8x256xf32>
    %224 = arith.addf %221, %223 : vector<8x256xf32>
    %225 = vector.extract_strided_slice %224 {offsets = [0, 0], sizes = [8, 64], strides = [1, 1]} : vector<8x256xf32> to vector<8x64xf32>
    %226 = arith.negf %225 : vector<8x64xf32>
    %227 = math.exp %226 : vector<8x64xf32>
    %cst_61 = arith.constant 1.000000e+00 : f32
    %228 = vector.broadcast %cst_61 : f32 to vector<8x64xf32>
    %229 = arith.addf %228, %227 : vector<8x64xf32>
    %230 = arith.divf %228, %229 : vector<8x64xf32>
    %231 = vector.extract_strided_slice %224 {offsets = [0, 64], sizes = [8, 64], strides = [1, 1]} : vector<8x256xf32> to vector<8x64xf32>
    %232 = arith.negf %231 : vector<8x64xf32>
    %233 = math.exp %232 : vector<8x64xf32>
    %cst_62 = arith.constant 1.000000e+00 : f32
    %234 = vector.broadcast %cst_62 : f32 to vector<8x64xf32>
    %235 = arith.addf %234, %233 : vector<8x64xf32>
    %236 = arith.divf %234, %235 : vector<8x64xf32>
    %237 = vector.extract_strided_slice %224 {offsets = [0, 128], sizes = [8, 64], strides = [1, 1]} : vector<8x256xf32> to vector<8x64xf32>
    %238 = math.tanh %237 : vector<8x64xf32>
    %239 = vector.extract_strided_slice %224 {offsets = [0, 192], sizes = [8, 64], strides = [1, 1]} : vector<8x256xf32> to vector<8x64xf32>
    %240 = arith.negf %239 : vector<8x64xf32>
    %241 = math.exp %240 : vector<8x64xf32>
    %cst_63 = arith.constant 1.000000e+00 : f32
    %242 = vector.broadcast %cst_63 : f32 to vector<8x64xf32>
    %243 = arith.addf %242, %241 : vector<8x64xf32>
    %244 = arith.divf %242, %243 : vector<8x64xf32>
    %245 = arith.mulf %236, %216 : vector<8x64xf32>
    %246 = arith.mulf %230, %238 : vector<8x64xf32>
    %247 = arith.addf %245, %246 : vector<8x64xf32>
    %248 = math.tanh %247 : vector<8x64xf32>
    %249 = arith.mulf %244, %248 : vector<8x64xf32>
    %c56_64 = arith.constant 56 : index
    %c0_65 = arith.constant 0 : index
    %250 = vector.load %arg10[%c56_64, %c0_65] : memref<64x256xf32, #tpu.memory_space<vmem>>, vector<8x256xf32>
    %c0_66 = arith.constant 0 : index
    %c0_67 = arith.constant 0 : index
    %251 = vector.load %arg10[%c0_66, %c0_67] : memref<64x256xf32, #tpu.memory_space<vmem>>, vector<8x256xf32>
    %252 = arith.select %18, %250, %251 : vector<8x256xi1>, vector<8x256xf32>
    %253 = arith.truncf %249 : vector<8x64xf32> to vector<8x64xbf16>
    %cst_68 = arith.constant dense<0.000000e+00> : vector<8x256xf32>
    %254 = tpu.matmul %253, %30, %cst_68 {dimension_numbers = #tpu.dot_dimension_numbers<[1], [0], [0], [1], [0, 0, 1, 1], [], []>} : vector<8x64xbf16>, vector<64x256xbf16>, vector<8x256xf32> -> vector<8x256xf32>
    %255 = arith.addf %252, %254 : vector<8x256xf32>
    %256 = vector.extract_strided_slice %255 {offsets = [0, 0], sizes = [8, 64], strides = [1, 1]} : vector<8x256xf32> to vector<8x64xf32>
    %257 = arith.negf %256 : vector<8x64xf32>
    %258 = math.exp %257 : vector<8x64xf32>
    %cst_69 = arith.constant 1.000000e+00 : f32
    %259 = vector.broadcast %cst_69 : f32 to vector<8x64xf32>
    %260 = arith.addf %259, %258 : vector<8x64xf32>
    %261 = arith.divf %259, %260 : vector<8x64xf32>
    %262 = vector.extract_strided_slice %255 {offsets = [0, 64], sizes = [8, 64], strides = [1, 1]} : vector<8x256xf32> to vector<8x64xf32>
    %263 = arith.negf %262 : vector<8x64xf32>
    %264 = math.exp %263 : vector<8x64xf32>
    %cst_70 = arith.constant 1.000000e+00 : f32
    %265 = vector.broadcast %cst_70 : f32 to vector<8x64xf32>
    %266 = arith.addf %265, %264 : vector<8x64xf32>
    %267 = arith.divf %265, %266 : vector<8x64xf32>
    %268 = vector.extract_strided_slice %255 {offsets = [0, 128], sizes = [8, 64], strides = [1, 1]} : vector<8x256xf32> to vector<8x64xf32>
    %269 = math.tanh %268 : vector<8x64xf32>
    %270 = vector.extract_strided_slice %255 {offsets = [0, 192], sizes = [8, 64], strides = [1, 1]} : vector<8x256xf32> to vector<8x64xf32>
    %271 = arith.negf %270 : vector<8x64xf32>
    %272 = math.exp %271 : vector<8x64xf32>
    %cst_71 = arith.constant 1.000000e+00 : f32
    %273 = vector.broadcast %cst_71 : f32 to vector<8x64xf32>
    %274 = arith.addf %273, %272 : vector<8x64xf32>
    %275 = arith.divf %273, %274 : vector<8x64xf32>
    %276 = arith.mulf %267, %247 : vector<8x64xf32>
    %277 = arith.mulf %261, %269 : vector<8x64xf32>
    %278 = arith.addf %276, %277 : vector<8x64xf32>
    %279 = math.tanh %278 : vector<8x64xf32>
    %280 = arith.mulf %275, %279 : vector<8x64xf32>
    %281 = arith.select %21, %63, %280 : vector<8x64xi1>, vector<8x64xf32>
    %282 = arith.select %21, %94, %249 : vector<8x64xi1>, vector<8x64xf32>
    %283 = arith.select %21, %125, %218 : vector<8x64xi1>, vector<8x64xf32>
    %284 = arith.select %21, %156, %187 : vector<8x64xi1>, vector<8x64xf32>
    %285 = arith.select %21, %187, %156 : vector<8x64xi1>, vector<8x64xf32>
    %286 = arith.select %21, %218, %125 : vector<8x64xi1>, vector<8x64xf32>
    %287 = arith.select %21, %249, %94 : vector<8x64xi1>, vector<8x64xf32>
    %288 = arith.select %21, %280, %63 : vector<8x64xi1>, vector<8x64xf32>
    %289 = tpu.concatenate %281, %282, %283, %284, %285, %286, %287, %288 in 0 : vector<8x64xf32>, vector<8x64xf32>, vector<8x64xf32>, vector<8x64xf32>, vector<8x64xf32>, vector<8x64xf32>, vector<8x64xf32>, vector<8x64xf32> -> vector<64x64xf32>
    %290 = arith.truncf %289 : vector<64x64xf32> to vector<64x64xbf16>
    %c0_72 = arith.constant 0 : index
    %c0_73 = arith.constant 0 : index
    %291 = vector.load %arg4[%c0_72, %c0_73] : memref<64x256xbf16, #tpu.memory_space<vmem>>, vector<64x256xbf16>
    %cst_74 = arith.constant dense<0.000000e+00> : vector<64x256xf32>
    %292 = tpu.matmul %290, %291, %cst_74 {dimension_numbers = #tpu.dot_dimension_numbers<[1], [0], [0], [1], [0, 0, 1, 1], [], []>} : vector<64x64xbf16>, vector<64x256xbf16>, vector<64x256xf32> -> vector<64x256xf32>
    %c0_75 = arith.constant 0 : index
    %c0_76 = arith.constant 0 : index
    %293 = vector.load %arg6[%c0_75, %c0_76] : memref<1x256xf32, #tpu.memory_space<vmem>>, vector<1x256xf32>
    %294 = vector.broadcast %293 : vector<1x256xf32> to vector<64x256xf32>
    %295 = arith.addf %292, %294 : vector<64x256xf32>
    %c0_77 = arith.constant 0 : index
    %c0_78 = arith.constant 0 : index
    %296 = vector.load %arg10[%c0_77, %c0_78] : memref<64x256xf32, #tpu.memory_space<vmem>>, vector<64x256xf32>
    tpu.vector_store %arg10[%c0_77, %c0_78], %295 {strides = array<i32>} : memref<64x256xf32, #tpu.memory_space<vmem>>, vector<64x256xf32>,
    %c0_79 = arith.constant 0 : index
    %c0_80 = arith.constant 0 : index
    %297 = vector.load %arg5[%c0_79, %c0_80] : memref<64x256xbf16, #tpu.memory_space<vmem>>, vector<64x256xbf16>
    %cst_81 = arith.constant 0.000000e+00 : f32
    %298 = vector.broadcast %cst_81 : f32 to vector<8x64xf32>
    %cst_82 = arith.constant 0.000000e+00 : f32
    %299 = vector.broadcast %cst_82 : f32 to vector<8x64xf32>
    %c0_83 = arith.constant 0 : index
    %c0_84 = arith.constant 0 : index
    %300 = vector.load %arg10[%c0_83, %c0_84] : memref<64x256xf32, #tpu.memory_space<vmem>>, vector<8x256xf32>
    %c56_85 = arith.constant 56 : index
    %c0_86 = arith.constant 0 : index
    %301 = vector.load %arg10[%c56_85, %c0_86] : memref<64x256xf32, #tpu.memory_space<vmem>>, vector<8x256xf32>
    %302 = arith.select %18, %300, %301 : vector<8x256xi1>, vector<8x256xf32>
    %303 = arith.truncf %298 : vector<8x64xf32> to vector<8x64xbf16>
    %cst_87 = arith.constant dense<0.000000e+00> : vector<8x256xf32>
    %304 = tpu.matmul %303, %297, %cst_87 {dimension_numbers = #tpu.dot_dimension_numbers<[1], [0], [0], [1], [0, 0, 1, 1], [], []>} : vector<8x64xbf16>, vector<64x256xbf16>, vector<8x256xf32> -> vector<8x256xf32>
    %305 = arith.addf %302, %304 : vector<8x256xf32>
    %306 = vector.extract_strided_slice %305 {offsets = [0, 0], sizes = [8, 64], strides = [1, 1]} : vector<8x256xf32> to vector<8x64xf32>
    %307 = arith.negf %306 : vector<8x64xf32>
    %308 = math.exp %307 : vector<8x64xf32>
    %cst_88 = arith.constant 1.000000e+00 : f32
    %309 = vector.broadcast %cst_88 : f32 to vector<8x64xf32>
    %310 = arith.addf %309, %308 : vector<8x64xf32>
    %311 = arith.divf %309, %310 : vector<8x64xf32>
    %312 = vector.extract_strided_slice %305 {offsets = [0, 64], sizes = [8, 64], strides = [1, 1]} : vector<8x256xf32> to vector<8x64xf32>
    %313 = arith.negf %312 : vector<8x64xf32>
    %314 = math.exp %313 : vector<8x64xf32>
    %cst_89 = arith.constant 1.000000e+00 : f32
    %315 = vector.broadcast %cst_89 : f32 to vector<8x64xf32>
    %316 = arith.addf %315, %314 : vector<8x64xf32>
    %317 = arith.divf %315, %316 : vector<8x64xf32>
    %318 = vector.extract_strided_slice %305 {offsets = [0, 128], sizes = [8, 64], strides = [1, 1]} : vector<8x256xf32> to vector<8x64xf32>
    %319 = math.tanh %318 : vector<8x64xf32>
    %320 = vector.extract_strided_slice %305 {offsets = [0, 192], sizes = [8, 64], strides = [1, 1]} : vector<8x256xf32> to vector<8x64xf32>
    %321 = arith.negf %320 : vector<8x64xf32>
    %322 = math.exp %321 : vector<8x64xf32>
    %cst_90 = arith.constant 1.000000e+00 : f32
    %323 = vector.broadcast %cst_90 : f32 to vector<8x64xf32>
    %324 = arith.addf %323, %322 : vector<8x64xf32>
    %325 = arith.divf %323, %324 : vector<8x64xf32>
    %326 = arith.mulf %317, %299 : vector<8x64xf32>
    %327 = arith.mulf %311, %319 : vector<8x64xf32>
    %328 = arith.addf %326, %327 : vector<8x64xf32>
    %329 = math.tanh %328 : vector<8x64xf32>
    %330 = arith.mulf %325, %329 : vector<8x64xf32>
    %c8_91 = arith.constant 8 : index
    %c0_92 = arith.constant 0 : index
    %331 = vector.load %arg10[%c8_91, %c0_92] : memref<64x256xf32, #tpu.memory_space<vmem>>, vector<8x256xf32>
    %c48_93 = arith.constant 48 : index
    %c0_94 = arith.constant 0 : index
    %332 = vector.load %arg10[%c48_93, %c0_94] : memref<64x256xf32, #tpu.memory_space<vmem>>, vector<8x256xf32>
    %333 = arith.select %18, %331, %332 : vector<8x256xi1>, vector<8x256xf32>
    %334 = arith.truncf %330 : vector<8x64xf32> to vector<8x64xbf16>
    %cst_95 = arith.constant dense<0.000000e+00> : vector<8x256xf32>
    %335 = tpu.matmul %334, %297, %cst_95 {dimension_numbers = #tpu.dot_dimension_numbers<[1], [0], [0], [1], [0, 0, 1, 1], [], []>} : vector<8x64xbf16>, vector<64x256xbf16>, vector<8x256xf32> -> vector<8x256xf32>
    %336 = arith.addf %333, %335 : vector<8x256xf32>
    %337 = vector.extract_strided_slice %336 {offsets = [0, 0], sizes = [8, 64], strides = [1, 1]} : vector<8x256xf32> to vector<8x64xf32>
    %338 = arith.negf %337 : vector<8x64xf32>
    %339 = math.exp %338 : vector<8x64xf32>
    %cst_96 = arith.constant 1.000000e+00 : f32
    %340 = vector.broadcast %cst_96 : f32 to vector<8x64xf32>
    %341 = arith.addf %340, %339 : vector<8x64xf32>
    %342 = arith.divf %340, %341 : vector<8x64xf32>
    %343 = vector.extract_strided_slice %336 {offsets = [0, 64], sizes = [8, 64], strides = [1, 1]} : vector<8x256xf32> to vector<8x64xf32>
    %344 = arith.negf %343 : vector<8x64xf32>
    %345 = math.exp %344 : vector<8x64xf32>
    %cst_97 = arith.constant 1.000000e+00 : f32
    %346 = vector.broadcast %cst_97 : f32 to vector<8x64xf32>
    %347 = arith.addf %346, %345 : vector<8x64xf32>
    %348 = arith.divf %346, %347 : vector<8x64xf32>
    %349 = vector.extract_strided_slice %336 {offsets = [0, 128], sizes = [8, 64], strides = [1, 1]} : vector<8x256xf32> to vector<8x64xf32>
    %350 = math.tanh %349 : vector<8x64xf32>
    %351 = vector.extract_strided_slice %336 {offsets = [0, 192], sizes = [8, 64], strides = [1, 1]} : vector<8x256xf32> to vector<8x64xf32>
    %352 = arith.negf %351 : vector<8x64xf32>
    %353 = math.exp %352 : vector<8x64xf32>
    %cst_98 = arith.constant 1.000000e+00 : f32
    %354 = vector.broadcast %cst_98 : f32 to vector<8x64xf32>
    %355 = arith.addf %354, %353 : vector<8x64xf32>
    %356 = arith.divf %354, %355 : vector<8x64xf32>
    %357 = arith.mulf %348, %328 : vector<8x64xf32>
    %358 = arith.mulf %342, %350 : vector<8x64xf32>
    %359 = arith.addf %357, %358 : vector<8x64xf32>
    %360 = math.tanh %359 : vector<8x64xf32>
    %361 = arith.mulf %356, %360 : vector<8x64xf32>
    %c16_99 = arith.constant 16 : index
    %c0_100 = arith.constant 0 : index
    %362 = vector.load %arg10[%c16_99, %c0_100] : memref<64x256xf32, #tpu.memory_space<vmem>>, vector<8x256xf32>
    %c40_101 = arith.constant 40 : index
    %c0_102 = arith.constant 0 : index
    %363 = vector.load %arg10[%c40_101, %c0_102] : memref<64x256xf32, #tpu.memory_space<vmem>>, vector<8x256xf32>
    %364 = arith.select %18, %362, %363 : vector<8x256xi1>, vector<8x256xf32>
    %365 = arith.truncf %361 : vector<8x64xf32> to vector<8x64xbf16>
    %cst_103 = arith.constant dense<0.000000e+00> : vector<8x256xf32>
    %366 = tpu.matmul %365, %297, %cst_103 {dimension_numbers = #tpu.dot_dimension_numbers<[1], [0], [0], [1], [0, 0, 1, 1], [], []>} : vector<8x64xbf16>, vector<64x256xbf16>, vector<8x256xf32> -> vector<8x256xf32>
    %367 = arith.addf %364, %366 : vector<8x256xf32>
    %368 = vector.extract_strided_slice %367 {offsets = [0, 0], sizes = [8, 64], strides = [1, 1]} : vector<8x256xf32> to vector<8x64xf32>
    %369 = arith.negf %368 : vector<8x64xf32>
    %370 = math.exp %369 : vector<8x64xf32>
    %cst_104 = arith.constant 1.000000e+00 : f32
    %371 = vector.broadcast %cst_104 : f32 to vector<8x64xf32>
    %372 = arith.addf %371, %370 : vector<8x64xf32>
    %373 = arith.divf %371, %372 : vector<8x64xf32>
    %374 = vector.extract_strided_slice %367 {offsets = [0, 64], sizes = [8, 64], strides = [1, 1]} : vector<8x256xf32> to vector<8x64xf32>
    %375 = arith.negf %374 : vector<8x64xf32>
    %376 = math.exp %375 : vector<8x64xf32>
    %cst_105 = arith.constant 1.000000e+00 : f32
    %377 = vector.broadcast %cst_105 : f32 to vector<8x64xf32>
    %378 = arith.addf %377, %376 : vector<8x64xf32>
    %379 = arith.divf %377, %378 : vector<8x64xf32>
    %380 = vector.extract_strided_slice %367 {offsets = [0, 128], sizes = [8, 64], strides = [1, 1]} : vector<8x256xf32> to vector<8x64xf32>
    %381 = math.tanh %380 : vector<8x64xf32>
    %382 = vector.extract_strided_slice %367 {offsets = [0, 192], sizes = [8, 64], strides = [1, 1]} : vector<8x256xf32> to vector<8x64xf32>
    %383 = arith.negf %382 : vector<8x64xf32>
    %384 = math.exp %383 : vector<8x64xf32>
    %cst_106 = arith.constant 1.000000e+00 : f32
    %385 = vector.broadcast %cst_106 : f32 to vector<8x64xf32>
    %386 = arith.addf %385, %384 : vector<8x64xf32>
    %387 = arith.divf %385, %386 : vector<8x64xf32>
    %388 = arith.mulf %379, %359 : vector<8x64xf32>
    %389 = arith.mulf %373, %381 : vector<8x64xf32>
    %390 = arith.addf %388, %389 : vector<8x64xf32>
    %391 = math.tanh %390 : vector<8x64xf32>
    %392 = arith.mulf %387, %391 : vector<8x64xf32>
    %c24_107 = arith.constant 24 : index
    %c0_108 = arith.constant 0 : index
    %393 = vector.load %arg10[%c24_107, %c0_108] : memref<64x256xf32, #tpu.memory_space<vmem>>, vector<8x256xf32>
    %c32_109 = arith.constant 32 : index
    %c0_110 = arith.constant 0 : index
    %394 = vector.load %arg10[%c32_109, %c0_110] : memref<64x256xf32, #tpu.memory_space<vmem>>, vector<8x256xf32>
    %395 = arith.select %18, %393, %394 : vector<8x256xi1>, vector<8x256xf32>
    %396 = arith.truncf %392 : vector<8x64xf32> to vector<8x64xbf16>
    %cst_111 = arith.constant dense<0.000000e+00> : vector<8x256xf32>
    %397 = tpu.matmul %396, %297, %cst_111 {dimension_numbers = #tpu.dot_dimension_numbers<[1], [0], [0], [1], [0, 0, 1, 1], [], []>} : vector<8x64xbf16>, vector<64x256xbf16>, vector<8x256xf32> -> vector<8x256xf32>
    %398 = arith.addf %395, %397 : vector<8x256xf32>
    %399 = vector.extract_strided_slice %398 {offsets = [0, 0], sizes = [8, 64], strides = [1, 1]} : vector<8x256xf32> to vector<8x64xf32>
    %400 = arith.negf %399 : vector<8x64xf32>
    %401 = math.exp %400 : vector<8x64xf32>
    %cst_112 = arith.constant 1.000000e+00 : f32
    %402 = vector.broadcast %cst_112 : f32 to vector<8x64xf32>
    %403 = arith.addf %402, %401 : vector<8x64xf32>
    %404 = arith.divf %402, %403 : vector<8x64xf32>
    %405 = vector.extract_strided_slice %398 {offsets = [0, 64], sizes = [8, 64], strides = [1, 1]} : vector<8x256xf32> to vector<8x64xf32>
    %406 = arith.negf %405 : vector<8x64xf32>
    %407 = math.exp %406 : vector<8x64xf32>
    %cst_113 = arith.constant 1.000000e+00 : f32
    %408 = vector.broadcast %cst_113 : f32 to vector<8x64xf32>
    %409 = arith.addf %408, %407 : vector<8x64xf32>
    %410 = arith.divf %408, %409 : vector<8x64xf32>
    %411 = vector.extract_strided_slice %398 {offsets = [0, 128], sizes = [8, 64], strides = [1, 1]} : vector<8x256xf32> to vector<8x64xf32>
    %412 = math.tanh %411 : vector<8x64xf32>
    %413 = vector.extract_strided_slice %398 {offsets = [0, 192], sizes = [8, 64], strides = [1, 1]} : vector<8x256xf32> to vector<8x64xf32>
    %414 = arith.negf %413 : vector<8x64xf32>
    %415 = math.exp %414 : vector<8x64xf32>
    %cst_114 = arith.constant 1.000000e+00 : f32
    %416 = vector.broadcast %cst_114 : f32 to vector<8x64xf32>
    %417 = arith.addf %416, %415 : vector<8x64xf32>
    %418 = arith.divf %416, %417 : vector<8x64xf32>
    %419 = arith.mulf %410, %390 : vector<8x64xf32>
    %420 = arith.mulf %404, %412 : vector<8x64xf32>
    %421 = arith.addf %419, %420 : vector<8x64xf32>
    %422 = math.tanh %421 : vector<8x64xf32>
    %423 = arith.mulf %418, %422 : vector<8x64xf32>
    %c32_115 = arith.constant 32 : index
    %c0_116 = arith.constant 0 : index
    %424 = vector.load %arg10[%c32_115, %c0_116] : memref<64x256xf32, #tpu.memory_space<vmem>>, vector<8x256xf32>
    %c24_117 = arith.constant 24 : index
    %c0_118 = arith.constant 0 : index
    %425 = vector.load %arg10[%c24_117, %c0_118] : memref<64x256xf32, #tpu.memory_space<vmem>>, vector<8x256xf32>
    %426 = arith.select %18, %424, %425 : vector<8x256xi1>, vector<8x256xf32>
    %427 = arith.truncf %423 : vector<8x64xf32> to vector<8x64xbf16>
    %cst_119 = arith.constant dense<0.000000e+00> : vector<8x256xf32>
    %428 = tpu.matmul %427, %297, %cst_119 {dimension_numbers = #tpu.dot_dimension_numbers<[1], [0], [0], [1], [0, 0, 1, 1], [], []>} : vector<8x64xbf16>, vector<64x256xbf16>, vector<8x256xf32> -> vector<8x256xf32>
    %429 = arith.addf %426, %428 : vector<8x256xf32>
    %430 = vector.extract_strided_slice %429 {offsets = [0, 0], sizes = [8, 64], strides = [1, 1]} : vector<8x256xf32> to vector<8x64xf32>
    %431 = arith.negf %430 : vector<8x64xf32>
    %432 = math.exp %431 : vector<8x64xf32>
    %cst_120 = arith.constant 1.000000e+00 : f32
    %433 = vector.broadcast %cst_120 : f32 to vector<8x64xf32>
    %434 = arith.addf %433, %432 : vector<8x64xf32>
    %435 = arith.divf %433, %434 : vector<8x64xf32>
    %436 = vector.extract_strided_slice %429 {offsets = [0, 64], sizes = [8, 64], strides = [1, 1]} : vector<8x256xf32> to vector<8x64xf32>
    %437 = arith.negf %436 : vector<8x64xf32>
    %438 = math.exp %437 : vector<8x64xf32>
    %cst_121 = arith.constant 1.000000e+00 : f32
    %439 = vector.broadcast %cst_121 : f32 to vector<8x64xf32>
    %440 = arith.addf %439, %438 : vector<8x64xf32>
    %441 = arith.divf %439, %440 : vector<8x64xf32>
    %442 = vector.extract_strided_slice %429 {offsets = [0, 128], sizes = [8, 64], strides = [1, 1]} : vector<8x256xf32> to vector<8x64xf32>
    %443 = math.tanh %442 : vector<8x64xf32>
    %444 = vector.extract_strided_slice %429 {offsets = [0, 192], sizes = [8, 64], strides = [1, 1]} : vector<8x256xf32> to vector<8x64xf32>
    %445 = arith.negf %444 : vector<8x64xf32>
    %446 = math.exp %445 : vector<8x64xf32>
    %cst_122 = arith.constant 1.000000e+00 : f32
    %447 = vector.broadcast %cst_122 : f32 to vector<8x64xf32>
    %448 = arith.addf %447, %446 : vector<8x64xf32>
    %449 = arith.divf %447, %448 : vector<8x64xf32>
    %450 = arith.mulf %441, %421 : vector<8x64xf32>
    %451 = arith.mulf %435, %443 : vector<8x64xf32>
    %452 = arith.addf %450, %451 : vector<8x64xf32>
    %453 = math.tanh %452 : vector<8x64xf32>
    %454 = arith.mulf %449, %453 : vector<8x64xf32>
    %c40_123 = arith.constant 40 : index
    %c0_124 = arith.constant 0 : index
    %455 = vector.load %arg10[%c40_123, %c0_124] : memref<64x256xf32, #tpu.memory_space<vmem>>, vector<8x256xf32>
    %c16_125 = arith.constant 16 : index
    %c0_126 = arith.constant 0 : index
    %456 = vector.load %arg10[%c16_125, %c0_126] : memref<64x256xf32, #tpu.memory_space<vmem>>, vector<8x256xf32>
    %457 = arith.select %18, %455, %456 : vector<8x256xi1>, vector<8x256xf32>
    %458 = arith.truncf %454 : vector<8x64xf32> to vector<8x64xbf16>
    %cst_127 = arith.constant dense<0.000000e+00> : vector<8x256xf32>
    %459 = tpu.matmul %458, %297, %cst_127 {dimension_numbers = #tpu.dot_dimension_numbers<[1], [0], [0], [1], [0, 0, 1, 1], [], []>} : vector<8x64xbf16>, vector<64x256xbf16>, vector<8x256xf32> -> vector<8x256xf32>
    %460 = arith.addf %457, %459 : vector<8x256xf32>
    %461 = vector.extract_strided_slice %460 {offsets = [0, 0], sizes = [8, 64], strides = [1, 1]} : vector<8x256xf32> to vector<8x64xf32>
    %462 = arith.negf %461 : vector<8x64xf32>
    %463 = math.exp %462 : vector<8x64xf32>
    %cst_128 = arith.constant 1.000000e+00 : f32
    %464 = vector.broadcast %cst_128 : f32 to vector<8x64xf32>
    %465 = arith.addf %464, %463 : vector<8x64xf32>
    %466 = arith.divf %464, %465 : vector<8x64xf32>
    %467 = vector.extract_strided_slice %460 {offsets = [0, 64], sizes = [8, 64], strides = [1, 1]} : vector<8x256xf32> to vector<8x64xf32>
    %468 = arith.negf %467 : vector<8x64xf32>
    %469 = math.exp %468 : vector<8x64xf32>
    %cst_129 = arith.constant 1.000000e+00 : f32
    %470 = vector.broadcast %cst_129 : f32 to vector<8x64xf32>
    %471 = arith.addf %470, %469 : vector<8x64xf32>
    %472 = arith.divf %470, %471 : vector<8x64xf32>
    %473 = vector.extract_strided_slice %460 {offsets = [0, 128], sizes = [8, 64], strides = [1, 1]} : vector<8x256xf32> to vector<8x64xf32>
    %474 = math.tanh %473 : vector<8x64xf32>
    %475 = vector.extract_strided_slice %460 {offsets = [0, 192], sizes = [8, 64], strides = [1, 1]} : vector<8x256xf32> to vector<8x64xf32>
    %476 = arith.negf %475 : vector<8x64xf32>
    %477 = math.exp %476 : vector<8x64xf32>
    %cst_130 = arith.constant 1.000000e+00 : f32
    %478 = vector.broadcast %cst_130 : f32 to vector<8x64xf32>
    %479 = arith.addf %478, %477 : vector<8x64xf32>
    %480 = arith.divf %478, %479 : vector<8x64xf32>
    %481 = arith.mulf %472, %452 : vector<8x64xf32>
    %482 = arith.mulf %466, %474 : vector<8x64xf32>
    %483 = arith.addf %481, %482 : vector<8x64xf32>
    %484 = math.tanh %483 : vector<8x64xf32>
    %485 = arith.mulf %480, %484 : vector<8x64xf32>
    %c48_131 = arith.constant 48 : index
    %c0_132 = arith.constant 0 : index
    %486 = vector.load %arg10[%c48_131, %c0_132] : memref<64x256xf32, #tpu.memory_space<vmem>>, vector<8x256xf32>
    %c8_133 = arith.constant 8 : index
    %c0_134 = arith.constant 0 : index
    %487 = vector.load %arg10[%c8_133, %c0_134] : memref<64x256xf32, #tpu.memory_space<vmem>>, vector<8x256xf32>
    %488 = arith.select %18, %486, %487 : vector<8x256xi1>, vector<8x256xf32>
    %489 = arith.truncf %485 : vector<8x64xf32> to vector<8x64xbf16>
    %cst_135 = arith.constant dense<0.000000e+00> : vector<8x256xf32>
    %490 = tpu.matmul %489, %297, %cst_135 {dimension_numbers = #tpu.dot_dimension_numbers<[1], [0], [0], [1], [0, 0, 1, 1], [], []>} : vector<8x64xbf16>, vector<64x256xbf16>, vector<8x256xf32> -> vector<8x256xf32>
    %491 = arith.addf %488, %490 : vector<8x256xf32>
    %492 = vector.extract_strided_slice %491 {offsets = [0, 0], sizes = [8, 64], strides = [1, 1]} : vector<8x256xf32> to vector<8x64xf32>
    %493 = arith.negf %492 : vector<8x64xf32>
    %494 = math.exp %493 : vector<8x64xf32>
    %cst_136 = arith.constant 1.000000e+00 : f32
    %495 = vector.broadcast %cst_136 : f32 to vector<8x64xf32>
    %496 = arith.addf %495, %494 : vector<8x64xf32>
    %497 = arith.divf %495, %496 : vector<8x64xf32>
    %498 = vector.extract_strided_slice %491 {offsets = [0, 64], sizes = [8, 64], strides = [1, 1]} : vector<8x256xf32> to vector<8x64xf32>
    %499 = arith.negf %498 : vector<8x64xf32>
    %500 = math.exp %499 : vector<8x64xf32>
    %cst_137 = arith.constant 1.000000e+00 : f32
    %501 = vector.broadcast %cst_137 : f32 to vector<8x64xf32>
    %502 = arith.addf %501, %500 : vector<8x64xf32>
    %503 = arith.divf %501, %502 : vector<8x64xf32>
    %504 = vector.extract_strided_slice %491 {offsets = [0, 128], sizes = [8, 64], strides = [1, 1]} : vector<8x256xf32> to vector<8x64xf32>
    %505 = math.tanh %504 : vector<8x64xf32>
    %506 = vector.extract_strided_slice %491 {offsets = [0, 192], sizes = [8, 64], strides = [1, 1]} : vector<8x256xf32> to vector<8x64xf32>
    %507 = arith.negf %506 : vector<8x64xf32>
    %508 = math.exp %507 : vector<8x64xf32>
    %cst_138 = arith.constant 1.000000e+00 : f32
    %509 = vector.broadcast %cst_138 : f32 to vector<8x64xf32>
    %510 = arith.addf %509, %508 : vector<8x64xf32>
    %511 = arith.divf %509, %510 : vector<8x64xf32>
    %512 = arith.mulf %503, %483 : vector<8x64xf32>
    %513 = arith.mulf %497, %505 : vector<8x64xf32>
    %514 = arith.addf %512, %513 : vector<8x64xf32>
    %515 = math.tanh %514 : vector<8x64xf32>
    %516 = arith.mulf %511, %515 : vector<8x64xf32>
    %c56_139 = arith.constant 56 : index
    %c0_140 = arith.constant 0 : index
    %517 = vector.load %arg10[%c56_139, %c0_140] : memref<64x256xf32, #tpu.memory_space<vmem>>, vector<8x256xf32>
    %c0_141 = arith.constant 0 : index
    %c0_142 = arith.constant 0 : index
    %518 = vector.load %arg10[%c0_141, %c0_142] : memref<64x256xf32, #tpu.memory_space<vmem>>, vector<8x256xf32>
    %519 = arith.select %18, %517, %518 : vector<8x256xi1>, vector<8x256xf32>
    %520 = arith.truncf %516 : vector<8x64xf32> to vector<8x64xbf16>
    %cst_143 = arith.constant dense<0.000000e+00> : vector<8x256xf32>
    %521 = tpu.matmul %520, %297, %cst_143 {dimension_numbers = #tpu.dot_dimension_numbers<[1], [0], [0], [1], [0, 0, 1, 1], [], []>} : vector<8x64xbf16>, vector<64x256xbf16>, vector<8x256xf32> -> vector<8x256xf32>
    %522 = arith.addf %519, %521 : vector<8x256xf32>
    %523 = vector.extract_strided_slice %522 {offsets = [0, 0], sizes = [8, 64], strides = [1, 1]} : vector<8x256xf32> to vector<8x64xf32>
    %524 = arith.negf %523 : vector<8x64xf32>
    %525 = math.exp %524 : vector<8x64xf32>
    %cst_144 = arith.constant 1.000000e+00 : f32
    %526 = vector.broadcast %cst_144 : f32 to vector<8x64xf32>
    %527 = arith.addf %526, %525 : vector<8x64xf32>
    %528 = arith.divf %526, %527 : vector<8x64xf32>
    %529 = vector.extract_strided_slice %522 {offsets = [0, 64], sizes = [8, 64], strides = [1, 1]} : vector<8x256xf32> to vector<8x64xf32>
    %530 = arith.negf %529 : vector<8x64xf32>
    %531 = math.exp %530 : vector<8x64xf32>
    %cst_145 = arith.constant 1.000000e+00 : f32
    %532 = vector.broadcast %cst_145 : f32 to vector<8x64xf32>
    %533 = arith.addf %532, %531 : vector<8x64xf32>
    %534 = arith.divf %532, %533 : vector<8x64xf32>
    %535 = vector.extract_strided_slice %522 {offsets = [0, 128], sizes = [8, 64], strides = [1, 1]} : vector<8x256xf32> to vector<8x64xf32>
    %536 = math.tanh %535 : vector<8x64xf32>
    %537 = vector.extract_strided_slice %522 {offsets = [0, 192], sizes = [8, 64], strides = [1, 1]} : vector<8x256xf32> to vector<8x64xf32>
    %538 = arith.negf %537 : vector<8x64xf32>
    %539 = math.exp %538 : vector<8x64xf32>
    %cst_146 = arith.constant 1.000000e+00 : f32
    %540 = vector.broadcast %cst_146 : f32 to vector<8x64xf32>
    %541 = arith.addf %540, %539 : vector<8x64xf32>
    %542 = arith.divf %540, %541 : vector<8x64xf32>
    %543 = arith.mulf %534, %514 : vector<8x64xf32>
    %544 = arith.mulf %528, %536 : vector<8x64xf32>
    %545 = arith.addf %543, %544 : vector<8x64xf32>
    %546 = math.tanh %545 : vector<8x64xf32>
    %547 = arith.mulf %542, %546 : vector<8x64xf32>
    %548 = arith.select %21, %547, %330 : vector<8x64xi1>, vector<8x64xf32>
    %549 = arith.truncf %548 : vector<8x64xf32> to vector<8x64xbf16>
    %c0_147 = arith.constant 0 : index
    %c0_148 = arith.constant 0 : index
    %550 = vector.load %arg7[%c0_147, %c0_148] : memref<64x10xbf16, #tpu.memory_space<vmem>>, vector<64x10xbf16>
    %cst_149 = arith.constant dense<0.000000e+00> : vector<8x10xf32>
    %551 = tpu.matmul %549, %550, %cst_149 {dimension_numbers = #tpu.dot_dimension_numbers<[1], [0], [0], [1], [0, 0, 1, 1], [], []>} : vector<8x64xbf16>, vector<64x10xbf16>, vector<8x10xf32> -> vector<8x10xf32>
    %c0_150 = arith.constant 0 : index
    %c0_151 = arith.constant 0 : index
    %552 = vector.load %arg8[%c0_150, %c0_151] : memref<1x10xf32, #tpu.memory_space<vmem>>, vector<1x10xf32>
    %553 = vector.broadcast %552 : vector<1x10xf32> to vector<8x10xf32>
    %554 = arith.addf %551, %553 : vector<8x10xf32>
    %c0_152 = arith.constant 0 : index
    %c0_153 = arith.constant 0 : index
    %555 = vector.load %arg9[%c0_152, %c0_153] : memref<8x10xf32, #tpu.memory_space<vmem>>, vector<8x10xf32>
    tpu.vector_store %arg9[%c0_152, %c0_153], %554 {strides = array<i32>} : memref<8x10xf32, #tpu.memory_space<vmem>>, vector<8x10xf32>,
    return
  }
}

</mosaic_0001>

<llo_original>
// kernel: lstm_model_forward.1
$region0: #{lstm_model_forward.1}
  #allocation0 [shape = 'u32[]', space=smem, size = 0x4, offset = 0x4, fixed_abs, tag = 'smem constant byte address 0x4 - core index']
  #allocation1 [shape = 'u32[72,128]{1,0:T(1,128)}', space=vmem, size = 0x9000, scoped, tag = 'internal scratch']
  #allocation2 [shape = 'f32[64,256]{1,0:T(8,128)}', space=vmem, size = 0x10000, scoped, tag = 'scratch operand']
  %s0 = inlined_call_operand.vmem [shape: f32[64,16], index: 0, kind: input, shape index: {}]
  %s1 = inlined_call_operand.vmem [shape: bf16[16,256], index: 1, kind: input, shape index: {}]
  %s2 = inlined_call_operand.vmem [shape: bf16[64,256], index: 2, kind: input, shape index: {}]
  %s3 = inlined_call_operand.vmem [shape: f32[1,256], index: 3, kind: input, shape index: {}]
  %s4 = inlined_call_operand.vmem [shape: bf16[64,256], index: 4, kind: input, shape index: {}]
  %s5 = inlined_call_operand.vmem [shape: bf16[64,256], index: 5, kind: input, shape index: {}]
  %s6 = inlined_call_operand.vmem [shape: f32[1,256], index: 6, kind: input, shape index: {}]
  %s7 = inlined_call_operand.vmem [shape: bf16[64,10], index: 7, kind: input, shape index: {}]
  %s8 = inlined_call_operand.vmem [shape: f32[1,10], index: 8, kind: input, shape index: {}]
  %s9 = inlined_call_operand.vmem [shape: f32[8,10], index: 9, kind: output, shape index: {}]
  %s10 = sld [smem:[#allocation0]]
  $region46: #{lstm_model_forward.1} parent=0
    _
  %s12 = ssub.s32 1, %s10
  %s13 = scalar_select 0, %s12, %s10
  // Predicated region
  $region2: #{lstm_model_forward.1} parent=0 // pred_check
    _
  $region3: #{lstm_model_forward.1} parent=0 // pred_check_branch
    %15 = sbr.rel (0) target = $region5
  $region4: #{lstm_model_forward.1} parent=0 // pred_region
    _
  $region5: #{lstm_model_forward.1} parent=0 // pred_fallthru
    _
  // Predicated region
  $region6: #{lstm_model_forward.1} parent=0 // pred_check
    _
  $region7: #{lstm_model_forward.1} parent=0 // pred_check_branch
    %17 = sbr.rel (0) target = $region9
  $region8: #{lstm_model_forward.1} parent=0 // pred_region
    _
  $region9: #{lstm_model_forward.1} parent=0 // pred_fallthru
    _
  // Predicated region
  $region10: #{lstm_model_forward.1} parent=0 // pred_check
    _
  $region11: #{lstm_model_forward.1} parent=0 // pred_check_branch
    %19 = sbr.rel (0) target = $region13
  $region12: #{lstm_model_forward.1} parent=0 // pred_region
    _
  $region13: #{lstm_model_forward.1} parent=0 // pred_fallthru
    _
  // Predicated region
  $region14: #{lstm_model_forward.1} parent=0 // pred_check
    _
  $region15: #{lstm_model_forward.1} parent=0 // pred_check_branch
    %21 = sbr.rel (0) target = $region17
  $region16: #{lstm_model_forward.1} parent=0 // pred_region
    _
  $region17: #{lstm_model_forward.1} parent=0 // pred_fallthru
    _
  // Predicated region
  $region18: #{lstm_model_forward.1} parent=0 // pred_check
    _
  $region19: #{lstm_model_forward.1} parent=0 // pred_check_branch
    %23 = sbr.rel (0) target = $region21
  $region20: #{lstm_model_forward.1} parent=0 // pred_region
    _
  $region21: #{lstm_model_forward.1} parent=0 // pred_fallthru
    _
  // Predicated region
  $region22: #{lstm_model_forward.1} parent=0 // pred_check
    _
  $region23: #{lstm_model_forward.1} parent=0 // pred_check_branch
    %25 = sbr.rel (0) target = $region25
  $region24: #{lstm_model_forward.1} parent=0 // pred_region
    _
  $region25: #{lstm_model_forward.1} parent=0 // pred_fallthru
    _
  // Predicated region
  $region26: #{lstm_model_forward.1} parent=0 // pred_check
    _
  $region27: #{lstm_model_forward.1} parent=0 // pred_check_branch
    %27 = sbr.rel (0) target = $region29
  $region28: #{lstm_model_forward.1} parent=0 // pred_region
    _
  $region29: #{lstm_model_forward.1} parent=0 // pred_fallthru
    _
  // Predicated region
  $region30: #{lstm_model_forward.1} parent=0 // pred_check
    _
  $region31: #{lstm_model_forward.1} parent=0 // pred_check_branch
    %29 = sbr.rel (0) target = $region33
  $region32: #{lstm_model_forward.1} parent=0 // pred_region
    _
  $region33: #{lstm_model_forward.1} parent=0 // pred_fallthru
    _
  // Predicated region
  $region34: #{lstm_model_forward.1} parent=0 // pred_check
    _
  $region35: #{lstm_model_forward.1} parent=0 // pred_check_branch
    %31 = sbr.rel (0) target = $region37
  $region36: #{lstm_model_forward.1} parent=0 // pred_region
    _
  $region37: #{lstm_model_forward.1} parent=0 // pred_fallthru
    _
  %v33 = vlaneseq
  %v34 = vand.u32 %v33, 127
  %v35 = vadd.s32 %v34, 128
  %vm36 = vcmp.lt.s32.totalorder %v34, 0
  %v37 = vsub.s32 0, %v34
  %v38 = vsel %vm36, %v37, %v34
  %v39 = vshrl.u32 %v38, 6
  %v40 = vand.u32 %v38, 63
  %v41 = vsub.s32 0, %v40
  %v42 = vsel %vm36, %v41, %v40
  %vm43 = vcmp.lt.s32.totalorder %v35, 0
  %v44 = vsub.s32 0, %v35
  %v45 = vsel %vm43, %v44, %v35
  %v46 = vshrl.u32 %v45, 6
  %v47 = vand.u32 %v45, 63
  %v48 = vsub.s32 0, %v47
  %v49 = vsel %vm43, %v48, %v47
  %vm50 = vcmp.ne.s32.totalorder %v42, 0
  %vm51 = vcmp.ne.s32.totalorder %v49, 0
  %vm52 = vcmp.lt.s32.totalorder %v42, 0
  %vm53 = vcmp.lt.s32.totalorder %v49, 0
  %vm54 = vmand %vm52, %vm50
  %vm55 = vmand %vm53, %vm51
  %v56 = vadd.s32 %v42, 64
  %v57 = vadd.s32 %v49, 64
  %v58 = vsel %vm54, %v56, %v42
  %v59 = vsel %vm55, %v57, %v49
  %vm60 = vcmp.lt.s32.totalorder %v58, 32
  %vm61 = vcmp.lt.s32.totalorder %v59, 32
  %vm62 = vcmp.lt.s32.totalorder %v34, 32
  %v63 = vld [vmem:[%s0] sm:$0xff]
  %v64 = vld [vmem:[%s0 + $0x8] sm:$0xff]
  %v65 = vld [vmem:[%s0 + $0x10] sm:$0xff]
  %v66 = vld [vmem:[%s0 + $0x18] sm:$0xff]
  %v67 = vld [vmem:[%s0 + $0x20] sm:$0xff]
  %v68 = vld [vmem:[%s0 + $0x28] sm:$0xff]
  %v69 = vld [vmem:[%s0 + $0x30] sm:$0xff]
  %v70 = vld [vmem:[%s0 + $0x38] sm:$0xff]
  %v71 = vpack.c.bf16 %v64, %v63
  %v72 = vpack.c.bf16 %v66, %v65
  %v73 = vpack.c.bf16 %v68, %v67
  %v74 = vpack.c.bf16 %v70, %v69
  %v75 = vld [vmem:[%s1] sm:$0xff]
  %v76 = vld [vmem:[%s1 + $0x8] sm:$0xff]
  %v77 = vld [vmem:[%s3] sm:$0x3]
  %v79 = vperm.slane %v77, 0
  %v80 = vperm.slane %v77, 1
  %v85 = vunpack.c.l.b16 %v75
  %v86 = vunpack.c.h.b16 %v75
  %v87 = vunpack.c.l.b16 %v76
  %v88 = vunpack.c.h.b16 %v76
  %v89 = vpack.c.b16 %v87, %v85
  %v90 = vpack.c.b16 %v88, %v86
  %vm93 = vcmask 130048
  %v95 = vsel %vm93, %v71, 0
  %v98 = vsel %vm93, %v72, 0
  %v101 = vsel %vm93, %v73, 0
  %v104 = vsel %vm93, %v74, 0
  %106 = vmatpush.bf16.msra.mxu0 0
  %107 = vmatpush.bf16.msra.mxu0 0
  %108 = vmatpush.bf16.msra.mxu0 0
  %109 = vmatpush.bf16.msra.mxu0 0
  %110 = vmatpush.bf16.msra.mxu0 0
  %111 = vmatpush.bf16.msra.mxu0 0
  %112 = vmatpush.bf16.msra.mxu0 0
  %113 = vmatpush.bf16.msra.mxu0 %v89
  %114 = vmatmul.bf16.gmra.mxu0 %v95
  %v115 = vpop.f32.mrf.mxu0
  %v116 = vadd.f32 %v79, %v115
  %v117 = vpop.f32.mrf.mxu0
  %v118 = vadd.f32 %v79, %v117
  %119 = vmatmul.bf16.gmra.mxu0 %v98
  %v120 = vpop.f32.mrf.mxu0
  %v121 = vadd.f32 %v79, %v120
  %v122 = vpop.f32.mrf.mxu0
  %v123 = vadd.f32 %v79, %v122
  %124 = vmatmul.bf16.gmra.mxu0 %v101
  %v125 = vpop.f32.mrf.mxu0
  %v126 = vadd.f32 %v79, %v125
  %v127 = vpop.f32.mrf.mxu0
  %v128 = vadd.f32 %v79, %v127
  %129 = vmatmul.bf16.gmra.mxu0 %v104
  %v130 = vpop.f32.mrf.mxu0
  %v131 = vadd.f32 %v79, %v130
  %v132 = vpop.f32.mrf.mxu0
  %v133 = vadd.f32 %v79, %v132
  %134 = vdwg.mxu0
  %135 = vmatpush.bf16.msra.mxu0 0
  %136 = vmatpush.bf16.msra.mxu0 0
  %137 = vmatpush.bf16.msra.mxu0 0
  %138 = vmatpush.bf16.msra.mxu0 0
  %139 = vmatpush.bf16.msra.mxu0 0
  %140 = vmatpush.bf16.msra.mxu0 0
  %141 = vmatpush.bf16.msra.mxu0 0
  %142 = vmatpush.bf16.msra.mxu0 %v90
  %143 = vmatmul.bf16.gmra.mxu0 %v95
  %v144 = vpop.f32.mrf.mxu0
  %v145 = vadd.f32 %v80, %v144
  %v146 = vpop.f32.mrf.mxu0
  %v147 = vadd.f32 %v80, %v146
  %148 = vmatmul.bf16.gmra.mxu0 %v98
  %v149 = vpop.f32.mrf.mxu0
  %v150 = vadd.f32 %v80, %v149
  %v151 = vpop.f32.mrf.mxu0
  %v152 = vadd.f32 %v80, %v151
  %153 = vmatmul.bf16.gmra.mxu0 %v101
  %v154 = vpop.f32.mrf.mxu0
  %v155 = vadd.f32 %v80, %v154
  %v156 = vpop.f32.mrf.mxu0
  %v157 = vadd.f32 %v80, %v156
  %158 = vmatmul.bf16.gmra.mxu0 %v104
  %v159 = vpop.f32.mrf.mxu0
  %v160 = vadd.f32 %v80, %v159
  %v161 = vpop.f32.mrf.mxu0
  %v162 = vadd.f32 %v80, %v161
  %163 = vdwg.mxu0
  %164 = vst [vmem:[#allocation2] sm:$0xff] %v116
  %165 = vst [vmem:[#allocation2 + $0x8] sm:$0xff] %v145
  %166 = vst [vmem:[#allocation2 + $0x10] sm:$0xff] %v118
  %167 = vst [vmem:[#allocation2 + $0x18] sm:$0xff] %v147
  %168 = vst [vmem:[#allocation2 + $0x20] sm:$0xff] %v121
  %169 = vst [vmem:[#allocation2 + $0x28] sm:$0xff] %v150
  %170 = vst [vmem:[#allocation2 + $0x30] sm:$0xff] %v123
  %171 = vst [vmem:[#allocation2 + $0x38] sm:$0xff] %v152
  %172 = vst [vmem:[#allocation2 + $0x40] sm:$0xff] %v126
  %173 = vst [vmem:[#allocation2 + $0x48] sm:$0xff] %v155
  %174 = vst [vmem:[#allocation2 + $0x50] sm:$0xff] %v128
  %175 = vst [vmem:[#allocation2 + $0x58] sm:$0xff] %v157
  %176 = vst [vmem:[#allocation2 + $0x60] sm:$0xff] %v131
  %177 = vst [vmem:[#allocation2 + $0x68] sm:$0xff] %v160
  %178 = vst [vmem:[#allocation2 + $0x70] sm:$0xff] %v133
  %179 = vst [vmem:[#allocation2 + $0x78] sm:$0xff] %v162
  %v180 = vld [vmem:[%s2] sm:$0xff]
  %v181 = vld [vmem:[%s2 + $0x8] sm:$0xff]
  %v182 = vld [vmem:[%s2 + $0x10] sm:$0xff]
  %v183 = vld [vmem:[%s2 + $0x18] sm:$0xff]
  %v184 = vld [vmem:[%s2 + $0x20] sm:$0xff]
  %v185 = vld [vmem:[%s2 + $0x28] sm:$0xff]
  %v186 = vld [vmem:[%s2 + $0x30] sm:$0xff]
  %v187 = vld [vmem:[%s2 + $0x38] sm:$0xff]
  %v188 = vld [vmem:[#allocation2] sm:$0xff]
  %v189 = vld [vmem:[#allocation2 + $0x8] sm:$0xff]
  %v190 = vld [vmem:[#allocation2 + $0x70] sm:$0xff]
  %v191 = vld [vmem:[#allocation2 + $0x78] sm:$0xff]
  %v192 = vsel %vm60, %v188, %v190
  %v193 = vsel %vm61, %v189, %v191
  %v202 = vunpack.c.l.b16 %v180
  %v203 = vunpack.c.h.b16 %v180
  %v204 = vunpack.c.l.b16 %v181
  %v205 = vunpack.c.h.b16 %v181
  %v206 = vunpack.c.l.b16 %v182
  %v207 = vunpack.c.h.b16 %v182
  %v208 = vunpack.c.l.b16 %v183
  %v209 = vunpack.c.h.b16 %v183
  %v210 = vunpack.c.l.b16 %v184
  %v211 = vunpack.c.h.b16 %v184
  %v212 = vunpack.c.l.b16 %v185
  %v213 = vunpack.c.h.b16 %v185
  %v214 = vunpack.c.l.b16 %v186
  %v215 = vunpack.c.h.b16 %v186
  %v216 = vunpack.c.l.b16 %v187
  %v217 = vunpack.c.h.b16 %v187
  %v218 = vpack.c.b16 %v204, %v202
  %v219 = vpack.c.b16 %v205, %v203
  %v220 = vpack.c.b16 %v208, %v206
  %v221 = vpack.c.b16 %v209, %v207
  %v222 = vpack.c.b16 %v212, %v210
  %v223 = vpack.c.b16 %v213, %v211
  %v224 = vpack.c.b16 %v216, %v214
  %v225 = vpack.c.b16 %v217, %v215
  %vm234 = vcmask 523264
  %v236 = vsel %vm234, 0, 0
  %238 = vmatpush.bf16.msra.mxu0 0
  %239 = vmatpush.bf16.msra.mxu0 0
  %240 = vmatpush.bf16.msra.mxu0 0
  %241 = vmatpush.bf16.msra.mxu0 0
  %242 = vmatpush.bf16.msra.mxu0 %v224
  %243 = vmatpush.bf16.msra.mxu0 %v222
  %244 = vmatpush.bf16.msra.mxu0 %v220
  %245 = vmatpush.bf16.msra.mxu0 %v218
  %246 = vmatmul.bf16.gmra.mxu0 %v236
  %v247 = vpop.f32.mrf.mxu0
  %v248 = vadd.f32 0.0, %v247
  %v249 = vpop.f32.mrf.mxu0
  %250 = vdwg.mxu0
  %251 = vmatpush.bf16.msra.mxu0 0
  %252 = vmatpush.bf16.msra.mxu0 0
  %253 = vmatpush.bf16.msra.mxu0 0
  %254 = vmatpush.bf16.msra.mxu0 0
  %255 = vmatpush.bf16.msra.mxu0 %v225
  %256 = vmatpush.bf16.msra.mxu0 %v223
  %257 = vmatpush.bf16.msra.mxu0 %v221
  %258 = vmatpush.bf16.msra.mxu0 %v219
  %259 = vmatmul.bf16.gmra.mxu0 %v236
  %v260 = vpop.f32.mrf.mxu0
  %v261 = vadd.f32 0.0, %v260
  %v262 = vpop.f32.mrf.mxu0
  %263 = vdwg.mxu0
  %v264 = vadd.f32 %v192, %v248
  %v265 = vadd.f32 %v193, %v261
  %v266 = vxor.u32 %v264, 2147483648
  %v267 = vmul.f32 %v266, 1.442695
  %v268 = vpow.pop %v267
  %v269 = vadd.f32 %v268, 1.0
  %v270 = vrcp.pop %v269
  %v271 = vmul.f32 %v269, %v270
  %v272 = vsub.f32 1.0, %v271
  %v273 = vmul.f32 %v270, %v272
  %v274 = vadd.f32 %v270, %v273
  %vm275 = vweird.f32 %v269
  %vm276 = vweird.f32 %v270
  %vm277 = vmor %vm275, %vm276
  %v278 = vsel %vm277, %v270, %v274
  %v279 = vand.u32 2147483647, %v269
  %vm280 = vcmp.eq.f32.partialorder %v279, 8.507059e+37
  %v281 = vand.u32 %v269, 2147483648
  %v282 = vor.u32 1.1754944e-38, %v281
  %v283 = vsel %vm280, %v282, %v278
  %v284 = vmul.f32 1.0, %v283
  %v285 = vtanh.pop %v265
  %v286 = vxor.u32 %v265, 2147483648
  %v287 = vmul.f32 %v286, 1.442695
  %v288 = vpow.pop %v287
  %v289 = vadd.f32 %v288, 1.0
  %v290 = vrcp.pop %v289
  %v291 = vmul.f32 %v289, %v290
  %v292 = vsub.f32 1.0, %v291
  %v293 = vmul.f32 %v290, %v292
  %v294 = vadd.f32 %v290, %v293
  %vm295 = vweird.f32 %v289
  %vm296 = vweird.f32 %v290
  %vm297 = vmor %vm295, %vm296
  %v298 = vsel %vm297, %v290, %v294
  %v299 = vand.u32 2147483647, %v289
  %vm300 = vcmp.eq.f32.partialorder %v299, 8.507059e+37
  %v301 = vand.u32 %v289, 2147483648
  %v302 = vor.u32 1.1754944e-38, %v301
  %v303 = vsel %vm300, %v302, %v298
  %v304 = vmul.f32 1.0, %v303
  %v305 = vmul.f32 %v284, 0.0
  %v306 = vmul.f32 %v284, %v285
  %308 = vrot.lane.b32.xlu0 %v306, 64
  %v309 = vpop.permute.xlu0 %308
  %v311 = vadd.f32 %v305, %v309
  %v312 = vtanh.pop %v311
  %v313 = vmul.f32 %v304, %v312
  %v314 = vld [vmem:[#allocation2 + $0x10] sm:$0xff]
  %v315 = vld [vmem:[#allocation2 + $0x18] sm:$0xff]
  %v316 = vld [vmem:[#allocation2 + $0x60] sm:$0xff]
  %v317 = vld [vmem:[#allocation2 + $0x68] sm:$0xff]
  %v318 = vsel %vm60, %v314, %v316
  %v319 = vsel %vm61, %v315, %v317
  %v320 = vpack.c.bf16 %v313, %v313
  %322 = vrot.lane.b32.xlu0 %v320, 64
  %v323 = vpop.permute.xlu0 %322
  %v325 = vsel %vm234, %v323, 0
  %327 = vmatpush.bf16.msra.mxu0 0
  %328 = vmatpush.bf16.msra.mxu0 0
  %329 = vmatpush.bf16.msra.mxu0 0
  %330 = vmatpush.bf16.msra.mxu0 0
  %331 = vmatpush.bf16.msra.mxu0 %v224
  %332 = vmatpush.bf16.msra.mxu0 %v222
  %333 = vmatpush.bf16.msra.mxu0 %v220
  %334 = vmatpush.bf16.msra.mxu0 %v218
  %335 = vmatmul.bf16.gmra.mxu0 %v325
  %v336 = vpop.f32.mrf.mxu0
  %v337 = vadd.f32 0.0, %v336
  %v338 = vpop.f32.mrf.mxu0
  %339 = vdwg.mxu0
  %340 = vmatpush.bf16.msra.mxu0 0
  %341 = vmatpush.bf16.msra.mxu0 0
  %342 = vmatpush.bf16.msra.mxu0 0
  %343 = vmatpush.bf16.msra.mxu0 0
  %344 = vmatpush.bf16.msra.mxu0 %v225
  %345 = vmatpush.bf16.msra.mxu0 %v223
  %346 = vmatpush.bf16.msra.mxu0 %v221
  %347 = vmatpush.bf16.msra.mxu0 %v219
  %348 = vmatmul.bf16.gmra.mxu0 %v325
  %v349 = vpop.f32.mrf.mxu0
  %v350 = vadd.f32 0.0, %v349
  %v351 = vpop.f32.mrf.mxu0
  %352 = vdwg.mxu0
  %v353 = vadd.f32 %v318, %v337
  %v354 = vadd.f32 %v319, %v350
  %v355 = vxor.u32 %v353, 2147483648
  %v356 = vmul.f32 %v355, 1.442695
  %v357 = vpow.pop %v356
  %v358 = vadd.f32 %v357, 1.0
  %v359 = vrcp.pop %v358
  %v360 = vmul.f32 %v358, %v359
  %v361 = vsub.f32 1.0, %v360
  %v362 = vmul.f32 %v359, %v361
  %v363 = vadd.f32 %v359, %v362
  %vm364 = vweird.f32 %v358
  %vm365 = vweird.f32 %v359
  %vm366 = vmor %vm364, %vm365
  %v367 = vsel %vm366, %v359, %v363
  %v368 = vand.u32 2147483647, %v358
  %vm369 = vcmp.eq.f32.partialorder %v368, 8.507059e+37
  %v370 = vand.u32 %v358, 2147483648
  %v371 = vor.u32 1.1754944e-38, %v370
  %v372 = vsel %vm369, %v371, %v367
  %v373 = vmul.f32 1.0, %v372
  %v374 = vtanh.pop %v354
  %v375 = vxor.u32 %v354, 2147483648
  %v376 = vmul.f32 %v375, 1.442695
  %v377 = vpow.pop %v376
  %v378 = vadd.f32 %v377, 1.0
  %v379 = vrcp.pop %v378
  %v380 = vmul.f32 %v378, %v379
  %v381 = vsub.f32 1.0, %v380
  %v382 = vmul.f32 %v379, %v381
  %v383 = vadd.f32 %v379, %v382
  %vm384 = vweird.f32 %v378
  %vm385 = vweird.f32 %v379
  %vm386 = vmor %vm384, %vm385
  %v387 = vsel %vm386, %v379, %v383
  %v388 = vand.u32 2147483647, %v378
  %vm389 = vcmp.eq.f32.partialorder %v388, 8.507059e+37
  %v390 = vand.u32 %v378, 2147483648
  %v391 = vor.u32 1.1754944e-38, %v390
  %v392 = vsel %vm389, %v391, %v387
  %v393 = vmul.f32 1.0, %v392
  %v394 = vmul.f32 %v373, %v311
  %v395 = vmul.f32 %v373, %v374
  %397 = vrot.lane.b32.xlu0 %v395, 64
  %v398 = vpop.permute.xlu0 %397
  %v400 = vadd.f32 %v394, %v398
  %v401 = vtanh.pop %v400
  %v402 = vmul.f32 %v393, %v401
  %v403 = vld [vmem:[#allocation2 + $0x20] sm:$0xff]
  %v404 = vld [vmem:[#allocation2 + $0x28] sm:$0xff]
  %v405 = vld [vmem:[#allocation2 + $0x50] sm:$0xff]
  %v406 = vld [vmem:[#allocation2 + $0x58] sm:$0xff]
  %v407 = vsel %vm60, %v403, %v405
  %v408 = vsel %vm61, %v404, %v406
  %v409 = vpack.c.bf16 %v402, %v402
  %411 = vrot.lane.b32.xlu0 %v409, 64
  %v412 = vpop.permute.xlu0 %411
  %v414 = vsel %vm234, %v412, 0
  %416 = vmatpush.bf16.msra.mxu0 0
  %417 = vmatpush.bf16.msra.mxu0 0
  %418 = vmatpush.bf16.msra.mxu0 0
  %419 = vmatpush.bf16.msra.mxu0 0
  %420 = vmatpush.bf16.msra.mxu0 %v224
  %421 = vmatpush.bf16.msra.mxu0 %v222
  %422 = vmatpush.bf16.msra.mxu0 %v220
  %423 = vmatpush.bf16.msra.mxu0 %v218
  %424 = vmatmul.bf16.gmra.mxu0 %v414
  %v425 = vpop.f32.mrf.mxu0
  %v426 = vadd.f32 0.0, %v425
  %v427 = vpop.f32.mrf.mxu0
  %428 = vdwg.mxu0
  %429 = vmatpush.bf16.msra.mxu0 0
  %430 = vmatpush.bf16.msra.mxu0 0
  %431 = vmatpush.bf16.msra.mxu0 0
  %432 = vmatpush.bf16.msra.mxu0 0
  %433 = vmatpush.bf16.msra.mxu0 %v225
  %434 = vmatpush.bf16.msra.mxu0 %v223
  %435 = vmatpush.bf16.msra.mxu0 %v221
  %436 = vmatpush.bf16.msra.mxu0 %v219
  %437 = vmatmul.bf16.gmra.mxu0 %v414
  %v438 = vpop.f32.mrf.mxu0
  %v439 = vadd.f32 0.0, %v438
  %v440 = vpop.f32.mrf.mxu0
  %441 = vdwg.mxu0
  %v442 = vadd.f32 %v407, %v426
  %v443 = vadd.f32 %v408, %v439
  %v444 = vxor.u32 %v442, 2147483648
  %v445 = vmul.f32 %v444, 1.442695
  %v446 = vpow.pop %v445
  %v447 = vadd.f32 %v446, 1.0
  %v448 = vrcp.pop %v447
  %v449 = vmul.f32 %v447, %v448
  %v450 = vsub.f32 1.0, %v449
  %v451 = vmul.f32 %v448, %v450
  %v452 = vadd.f32 %v448, %v451
  %vm453 = vweird.f32 %v447
  %vm454 = vweird.f32 %v448
  %vm455 = vmor %vm453, %vm454
  %v456 = vsel %vm455, %v448, %v452
  %v457 = vand.u32 2147483647, %v447
  %vm458 = vcmp.eq.f32.partialorder %v457, 8.507059e+37
  %v459 = vand.u32 %v447, 2147483648
  %v460 = vor.u32 1.1754944e-38, %v459
  %v461 = vsel %vm458, %v460, %v456
  %v462 = vmul.f32 1.0, %v461
  %v463 = vtanh.pop %v443
  %v464 = vxor.u32 %v443, 2147483648
  %v465 = vmul.f32 %v464, 1.442695
  %v466 = vpow.pop %v465
  %v467 = vadd.f32 %v466, 1.0
  %v468 = vrcp.pop %v467
  %v469 = vmul.f32 %v467, %v468
  %v470 = vsub.f32 1.0, %v469
  %v471 = vmul.f32 %v468, %v470
  %v472 = vadd.f32 %v468, %v471
  %vm473 = vweird.f32 %v467
  %vm474 = vweird.f32 %v468
  %vm475 = vmor %vm473, %vm474
  %v476 = vsel %vm475, %v468, %v472
  %v477 = vand.u32 2147483647, %v467
  %vm478 = vcmp.eq.f32.partialorder %v477, 8.507059e+37
  %v479 = vand.u32 %v467, 2147483648
  %v480 = vor.u32 1.1754944e-38, %v479
  %v481 = vsel %vm478, %v480, %v476
  %v482 = vmul.f32 1.0, %v481
  %v483 = vmul.f32 %v462, %v400
  %v484 = vmul.f32 %v462, %v463
  %486 = vrot.lane.b32.xlu0 %v484, 64
  %v487 = vpop.permute.xlu0 %486
  %v489 = vadd.f32 %v483, %v487
  %v490 = vtanh.pop %v489
  %v491 = vmul.f32 %v482, %v490
  %v492 = vld [vmem:[#allocation2 + $0x30] sm:$0xff]
  %v493 = vld [vmem:[#allocation2 + $0x38] sm:$0xff]
  %v494 = vld [vmem:[#allocation2 + $0x40] sm:$0xff]
  %v495 = vld [vmem:[#allocation2 + $0x48] sm:$0xff]
  %v496 = vsel %vm60, %v492, %v494
  %v497 = vsel %vm61, %v493, %v495
  %v498 = vpack.c.bf16 %v491, %v491
  %500 = vrot.lane.b32.xlu0 %v498, 64
  %v501 = vpop.permute.xlu0 %500
  %v503 = vsel %vm234, %v501, 0
  %505 = vmatpush.bf16.msra.mxu0 0
  %506 = vmatpush.bf16.msra.mxu0 0
  %507 = vmatpush.bf16.msra.mxu0 0
  %508 = vmatpush.bf16.msra.mxu0 0
  %509 = vmatpush.bf16.msra.mxu0 %v224
  %510 = vmatpush.bf16.msra.mxu0 %v222
  %511 = vmatpush.bf16.msra.mxu0 %v220
  %512 = vmatpush.bf16.msra.mxu0 %v218
  %513 = vmatmul.bf16.gmra.mxu0 %v503
  %v514 = vpop.f32.mrf.mxu0
  %v515 = vadd.f32 0.0, %v514
  %v516 = vpop.f32.mrf.mxu0
  %517 = vdwg.mxu0
  %518 = vmatpush.bf16.msra.mxu0 0
  %519 = vmatpush.bf16.msra.mxu0 0
  %520 = vmatpush.bf16.msra.mxu0 0
  %521 = vmatpush.bf16.msra.mxu0 0
  %522 = vmatpush.bf16.msra.mxu0 %v225
  %523 = vmatpush.bf16.msra.mxu0 %v223
  %524 = vmatpush.bf16.msra.mxu0 %v221
  %525 = vmatpush.bf16.msra.mxu0 %v219
  %526 = vmatmul.bf16.gmra.mxu0 %v503
  %v527 = vpop.f32.mrf.mxu0
  %v528 = vadd.f32 0.0, %v527
  %v529 = vpop.f32.mrf.mxu0
  %530 = vdwg.mxu0
  %v531 = vadd.f32 %v496, %v515
  %v532 = vadd.f32 %v497, %v528
  %v533 = vxor.u32 %v531, 2147483648
  %v534 = vmul.f32 %v533, 1.442695
  %v535 = vpow.pop %v534
  %v536 = vadd.f32 %v535, 1.0
  %v537 = vrcp.pop %v536
  %v538 = vmul.f32 %v536, %v537
  %v539 = vsub.f32 1.0, %v538
  %v540 = vmul.f32 %v537, %v539
  %v541 = vadd.f32 %v537, %v540
  %vm542 = vweird.f32 %v536
  %vm543 = vweird.f32 %v537
  %vm544 = vmor %vm542, %vm543
  %v545 = vsel %vm544, %v537, %v541
  %v546 = vand.u32 2147483647, %v536
  %vm547 = vcmp.eq.f32.partialorder %v546, 8.507059e+37
  %v548 = vand.u32 %v536, 2147483648
  %v549 = vor.u32 1.1754944e-38, %v548
  %v550 = vsel %vm547, %v549, %v545
  %v551 = vmul.f32 1.0, %v550
  %v552 = vtanh.pop %v532
  %v553 = vxor.u32 %v532, 2147483648
  %v554 = vmul.f32 %v553, 1.442695
  %v555 = vpow.pop %v554
  %v556 = vadd.f32 %v555, 1.0
  %v557 = vrcp.pop %v556
  %v558 = vmul.f32 %v556, %v557
  %v559 = vsub.f32 1.0, %v558
  %v560 = vmul.f32 %v557, %v559
  %v561 = vadd.f32 %v557, %v560
  %vm562 = vweird.f32 %v556
  %vm563 = vweird.f32 %v557
  %vm564 = vmor %vm562, %vm563
  %v565 = vsel %vm564, %v557, %v561
  %v566 = vand.u32 2147483647, %v556
  %vm567 = vcmp.eq.f32.partialorder %v566, 8.507059e+37
  %v568 = vand.u32 %v556, 2147483648
  %v569 = vor.u32 1.1754944e-38, %v568
  %v570 = vsel %vm567, %v569, %v565
  %v571 = vmul.f32 1.0, %v570
  %v572 = vmul.f32 %v551, %v489
  %v573 = vmul.f32 %v551, %v552
  %575 = vrot.lane.b32.xlu0 %v573, 64
  %v576 = vpop.permute.xlu0 %575
  %v578 = vadd.f32 %v572, %v576
  %v579 = vtanh.pop %v578
  %v580 = vmul.f32 %v571, %v579
  %v581 = vsel %vm60, %v494, %v492
  %v582 = vsel %vm61, %v495, %v493
  %v583 = vpack.c.bf16 %v580, %v580
  %585 = vrot.lane.b32.xlu0 %v583, 64
  %v586 = vpop.permute.xlu0 %585
  %v588 = vsel %vm234, %v586, 0
  %590 = vmatpush.bf16.msra.mxu0 0
  %591 = vmatpush.bf16.msra.mxu0 0
  %592 = vmatpush.bf16.msra.mxu0 0
  %593 = vmatpush.bf16.msra.mxu0 0
  %594 = vmatpush.bf16.msra.mxu0 %v224
  %595 = vmatpush.bf16.msra.mxu0 %v222
  %596 = vmatpush.bf16.msra.mxu0 %v220
  %597 = vmatpush.bf16.msra.mxu0 %v218
  %598 = vmatmul.bf16.gmra.mxu0 %v588
  %v599 = vpop.f32.mrf.mxu0
  %v600 = vadd.f32 0.0, %v599
  %v601 = vpop.f32.mrf.mxu0
  %602 = vdwg.mxu0
  %603 = vmatpush.bf16.msra.mxu0 0
  %604 = vmatpush.bf16.msra.mxu0 0
  %605 = vmatpush.bf16.msra.mxu0 0
  %606 = vmatpush.bf16.msra.mxu0 0
  %607 = vmatpush.bf16.msra.mxu0 %v225
  %608 = vmatpush.bf16.msra.mxu0 %v223
  %609 = vmatpush.bf16.msra.mxu0 %v221
  %610 = vmatpush.bf16.msra.mxu0 %v219
  %611 = vmatmul.bf16.gmra.mxu0 %v588
  %v612 = vpop.f32.mrf.mxu0
  %v613 = vadd.f32 0.0, %v612
  %v614 = vpop.f32.mrf.mxu0
  %615 = vdwg.mxu0
  %v616 = vadd.f32 %v581, %v600
  %v617 = vadd.f32 %v582, %v613
  %v618 = vxor.u32 %v616, 2147483648
  %v619 = vmul.f32 %v618, 1.442695
  %v620 = vpow.pop %v619
  %v621 = vadd.f32 %v620, 1.0
  %v622 = vrcp.pop %v621
  %v623 = vmul.f32 %v621, %v622
  %v624 = vsub.f32 1.0, %v623
  %v625 = vmul.f32 %v622, %v624
  %v626 = vadd.f32 %v622, %v625
  %vm627 = vweird.f32 %v621
  %vm628 = vweird.f32 %v622
  %vm629 = vmor %vm627, %vm628
  %v630 = vsel %vm629, %v622, %v626
  %v631 = vand.u32 2147483647, %v621
  %vm632 = vcmp.eq.f32.partialorder %v631, 8.507059e+37
  %v633 = vand.u32 %v621, 2147483648
  %v634 = vor.u32 1.1754944e-38, %v633
  %v635 = vsel %vm632, %v634, %v630
  %v636 = vmul.f32 1.0, %v635
  %v637 = vtanh.pop %v617
  %v638 = vxor.u32 %v617, 2147483648
  %v639 = vmul.f32 %v638, 1.442695
  %v640 = vpow.pop %v639
  %v641 = vadd.f32 %v640, 1.0
  %v642 = vrcp.pop %v641
  %v643 = vmul.f32 %v641, %v642
  %v644 = vsub.f32 1.0, %v643
  %v645 = vmul.f32 %v642, %v644
  %v646 = vadd.f32 %v642, %v645
  %vm647 = vweird.f32 %v641
  %vm648 = vweird.f32 %v642
  %vm649 = vmor %vm647, %vm648
  %v650 = vsel %vm649, %v642, %v646
  %v651 = vand.u32 2147483647, %v641
  %vm652 = vcmp.eq.f32.partialorder %v651, 8.507059e+37
  %v653 = vand.u32 %v641, 2147483648
  %v654 = vor.u32 1.1754944e-38, %v653
  %v655 = vsel %vm652, %v654, %v650
  %v656 = vmul.f32 1.0, %v655
  %v657 = vmul.f32 %v636, %v578
  %v658 = vmul.f32 %v636, %v637
  %660 = vrot.lane.b32.xlu0 %v658, 64
  %v661 = vpop.permute.xlu0 %660
  %v663 = vadd.f32 %v657, %v661
  %v664 = vtanh.pop %v663
  %v665 = vmul.f32 %v656, %v664
  %v666 = vsel %vm60, %v405, %v403
  %v667 = vsel %vm61, %v406, %v404
  %v668 = vpack.c.bf16 %v665, %v665
  %670 = vrot.lane.b32.xlu0 %v668, 64
  %v671 = vpop.permute.xlu0 %670
  %v673 = vsel %vm234, %v671, 0
  %675 = vmatpush.bf16.msra.mxu0 0
  %676 = vmatpush.bf16.msra.mxu0 0
  %677 = vmatpush.bf16.msra.mxu0 0
  %678 = vmatpush.bf16.msra.mxu0 0
  %679 = vmatpush.bf16.msra.mxu0 %v224
  %680 = vmatpush.bf16.msra.mxu0 %v222
  %681 = vmatpush.bf16.msra.mxu0 %v220
  %682 = vmatpush.bf16.msra.mxu0 %v218
  %683 = vmatmul.bf16.gmra.mxu0 %v673
  %v684 = vpop.f32.mrf.mxu0
  %v685 = vadd.f32 0.0, %v684
  %v686 = vpop.f32.mrf.mxu0
  %687 = vdwg.mxu0
  %688 = vmatpush.bf16.msra.mxu0 0
  %689 = vmatpush.bf16.msra.mxu0 0
  %690 = vmatpush.bf16.msra.mxu0 0
  %691 = vmatpush.bf16.msra.mxu0 0
  %692 = vmatpush.bf16.msra.mxu0 %v225
  %693 = vmatpush.bf16.msra.mxu0 %v223
  %694 = vmatpush.bf16.msra.mxu0 %v221
  %695 = vmatpush.bf16.msra.mxu0 %v219
  %696 = vmatmul.bf16.gmra.mxu0 %v673
  %v697 = vpop.f32.mrf.mxu0
  %v698 = vadd.f32 0.0, %v697
  %v699 = vpop.f32.mrf.mxu0
  %700 = vdwg.mxu0
  %v701 = vadd.f32 %v666, %v685
  %v702 = vadd.f32 %v667, %v698
  %v703 = vxor.u32 %v701, 2147483648
  %v704 = vmul.f32 %v703, 1.442695
  %v705 = vpow.pop %v704
  %v706 = vadd.f32 %v705, 1.0
  %v707 = vrcp.pop %v706
  %v708 = vmul.f32 %v706, %v707
  %v709 = vsub.f32 1.0, %v708
  %v710 = vmul.f32 %v707, %v709
  %v711 = vadd.f32 %v707, %v710
  %vm712 = vweird.f32 %v706
  %vm713 = vweird.f32 %v707
  %vm714 = vmor %vm712, %vm713
  %v715 = vsel %vm714, %v707, %v711
  %v716 = vand.u32 2147483647, %v706
  %vm717 = vcmp.eq.f32.partialorder %v716, 8.507059e+37
  %v718 = vand.u32 %v706, 2147483648
  %v719 = vor.u32 1.1754944e-38, %v718
  %v720 = vsel %vm717, %v719, %v715
  %v721 = vmul.f32 1.0, %v720
  %v722 = vtanh.pop %v702
  %v723 = vxor.u32 %v702, 2147483648
  %v724 = vmul.f32 %v723, 1.442695
  %v725 = vpow.pop %v724
  %v726 = vadd.f32 %v725, 1.0
  %v727 = vrcp.pop %v726
  %v728 = vmul.f32 %v726, %v727
  %v729 = vsub.f32 1.0, %v728
  %v730 = vmul.f32 %v727, %v729
  %v731 = vadd.f32 %v727, %v730
  %vm732 = vweird.f32 %v726
  %vm733 = vweird.f32 %v727
  %vm734 = vmor %vm732, %vm733
  %v735 = vsel %vm734, %v727, %v731
  %v736 = vand.u32 2147483647, %v726
  %vm737 = vcmp.eq.f32.partialorder %v736, 8.507059e+37
  %v738 = vand.u32 %v726, 2147483648
  %v739 = vor.u32 1.1754944e-38, %v738
  %v740 = vsel %vm737, %v739, %v735
  %v741 = vmul.f32 1.0, %v740
  %v742 = vmul.f32 %v721, %v663
  %v743 = vmul.f32 %v721, %v722
  %745 = vrot.lane.b32.xlu0 %v743, 64
  %v746 = vpop.permute.xlu0 %745
  %v748 = vadd.f32 %v742, %v746
  %v749 = vtanh.pop %v748
  %v750 = vmul.f32 %v741, %v749
  %v751 = vsel %vm60, %v316, %v314
  %v752 = vsel %vm61, %v317, %v315
  %v753 = vpack.c.bf16 %v750, %v750
  %755 = vrot.lane.b32.xlu0 %v753, 64
  %v756 = vpop.permute.xlu0 %755
  %v758 = vsel %vm234, %v756, 0
  %760 = vmatpush.bf16.msra.mxu0 0
  %761 = vmatpush.bf16.msra.mxu0 0
  %762 = vmatpush.bf16.msra.mxu0 0
  %763 = vmatpush.bf16.msra.mxu0 0
  %764 = vmatpush.bf16.msra.mxu0 %v224
  %765 = vmatpush.bf16.msra.mxu0 %v222
  %766 = vmatpush.bf16.msra.mxu0 %v220
  %767 = vmatpush.bf16.msra.mxu0 %v218
  %768 = vmatmul.bf16.gmra.mxu0 %v758
  %v769 = vpop.f32.mrf.mxu0
  %v770 = vadd.f32 0.0, %v769
  %v771 = vpop.f32.mrf.mxu0
  %772 = vdwg.mxu0
  %773 = vmatpush.bf16.msra.mxu0 0
  %774 = vmatpush.bf16.msra.mxu0 0
  %775 = vmatpush.bf16.msra.mxu0 0
  %776 = vmatpush.bf16.msra.mxu0 0
  %777 = vmatpush.bf16.msra.mxu0 %v225
  %778 = vmatpush.bf16.msra.mxu0 %v223
  %779 = vmatpush.bf16.msra.mxu0 %v221
  %780 = vmatpush.bf16.msra.mxu0 %v219
  %781 = vmatmul.bf16.gmra.mxu0 %v758
  %v782 = vpop.f32.mrf.mxu0
  %v783 = vadd.f32 0.0, %v782
  %v784 = vpop.f32.mrf.mxu0
  %785 = vdwg.mxu0
  %v786 = vadd.f32 %v751, %v770
  %v787 = vadd.f32 %v752, %v783
  %v788 = vxor.u32 %v786, 2147483648
  %v789 = vmul.f32 %v788, 1.442695
  %v790 = vpow.pop %v789
  %v791 = vadd.f32 %v790, 1.0
  %v792 = vrcp.pop %v791
  %v793 = vmul.f32 %v791, %v792
  %v794 = vsub.f32 1.0, %v793
  %v795 = vmul.f32 %v792, %v794
  %v796 = vadd.f32 %v792, %v795
  %vm797 = vweird.f32 %v791
  %vm798 = vweird.f32 %v792
  %vm799 = vmor %vm797, %vm798
  %v800 = vsel %vm799, %v792, %v796
  %v801 = vand.u32 2147483647, %v791
  %vm802 = vcmp.eq.f32.partialorder %v801, 8.507059e+37
  %v803 = vand.u32 %v791, 2147483648
  %v804 = vor.u32 1.1754944e-38, %v803
  %v805 = vsel %vm802, %v804, %v800
  %v806 = vmul.f32 1.0, %v805
  %v807 = vtanh.pop %v787
  %v808 = vxor.u32 %v787, 2147483648
  %v809 = vmul.f32 %v808, 1.442695
  %v810 = vpow.pop %v809
  %v811 = vadd.f32 %v810, 1.0
  %v812 = vrcp.pop %v811
  %v813 = vmul.f32 %v811, %v812
  %v814 = vsub.f32 1.0, %v813
  %v815 = vmul.f32 %v812, %v814
  %v816 = vadd.f32 %v812, %v815
  %vm817 = vweird.f32 %v811
  %vm818 = vweird.f32 %v812
  %vm819 = vmor %vm817, %vm818
  %v820 = vsel %vm819, %v812, %v816
  %v821 = vand.u32 2147483647, %v811
  %vm822 = vcmp.eq.f32.partialorder %v821, 8.507059e+37
  %v823 = vand.u32 %v811, 2147483648
  %v824 = vor.u32 1.1754944e-38, %v823
  %v825 = vsel %vm822, %v824, %v820
  %v826 = vmul.f32 1.0, %v825
  %v827 = vmul.f32 %v806, %v748
  %v828 = vmul.f32 %v806, %v807
  %830 = vrot.lane.b32.xlu0 %v828, 64
  %v831 = vpop.permute.xlu0 %830
  %v833 = vadd.f32 %v827, %v831
  %v834 = vtanh.pop %v833
  %v835 = vmul.f32 %v826, %v834
  %v836 = vsel %vm60, %v190, %v188
  %v837 = vsel %vm61, %v191, %v189
  %v838 = vpack.c.bf16 %v835, %v835
  %840 = vrot.lane.b32.xlu0 %v838, 64
  %v841 = vpop.permute.xlu0 %840
  %v843 = vsel %vm234, %v841, 0
  %845 = vmatpush.bf16.msra.mxu0 0
  %846 = vmatpush.bf16.msra.mxu0 0
  %847 = vmatpush.bf16.msra.mxu0 0
  %848 = vmatpush.bf16.msra.mxu0 0
  %849 = vmatpush.bf16.msra.mxu0 %v224
  %850 = vmatpush.bf16.msra.mxu0 %v222
  %851 = vmatpush.bf16.msra.mxu0 %v220
  %852 = vmatpush.bf16.msra.mxu0 %v218
  %853 = vmatmul.bf16.gmra.mxu0 %v843
  %v854 = vpop.f32.mrf.mxu0
  %v855 = vadd.f32 0.0, %v854
  %v856 = vpop.f32.mrf.mxu0
  %857 = vdwg.mxu0
  %858 = vmatpush.bf16.msra.mxu0 0
  %859 = vmatpush.bf16.msra.mxu0 0
  %860 = vmatpush.bf16.msra.mxu0 0
  %861 = vmatpush.bf16.msra.mxu0 0
  %862 = vmatpush.bf16.msra.mxu0 %v225
  %863 = vmatpush.bf16.msra.mxu0 %v223
  %864 = vmatpush.bf16.msra.mxu0 %v221
  %865 = vmatpush.bf16.msra.mxu0 %v219
  %866 = vmatmul.bf16.gmra.mxu0 %v843
  %v867 = vpop.f32.mrf.mxu0
  %v868 = vadd.f32 0.0, %v867
  %v869 = vpop.f32.mrf.mxu0
  %870 = vdwg.mxu0
  %v871 = vadd.f32 %v836, %v855
  %v872 = vadd.f32 %v837, %v868
  %v873 = vxor.u32 %v871, 2147483648
  %v874 = vmul.f32 %v873, 1.442695
  %v875 = vpow.pop %v874
  %v876 = vadd.f32 %v875, 1.0
  %v877 = vrcp.pop %v876
  %v878 = vmul.f32 %v876, %v877
  %v879 = vsub.f32 1.0, %v878
  %v880 = vmul.f32 %v877, %v879
  %v881 = vadd.f32 %v877, %v880
  %vm882 = vweird.f32 %v876
  %vm883 = vweird.f32 %v877
  %vm884 = vmor %vm882, %vm883
  %v885 = vsel %vm884, %v877, %v881
  %v886 = vand.u32 2147483647, %v876
  %vm887 = vcmp.eq.f32.partialorder %v886, 8.507059e+37
  %v888 = vand.u32 %v876, 2147483648
  %v889 = vor.u32 1.1754944e-38, %v888
  %v890 = vsel %vm887, %v889, %v885
  %v891 = vmul.f32 1.0, %v890
  %v892 = vtanh.pop %v872
  %v893 = vxor.u32 %v872, 2147483648
  %v894 = vmul.f32 %v893, 1.442695
  %v895 = vpow.pop %v894
  %v896 = vadd.f32 %v895, 1.0
  %v897 = vrcp.pop %v896
  %v898 = vmul.f32 %v896, %v897
  %v899 = vsub.f32 1.0, %v898
  %v900 = vmul.f32 %v897, %v899
  %v901 = vadd.f32 %v897, %v900
  %vm902 = vweird.f32 %v896
  %vm903 = vweird.f32 %v897
  %vm904 = vmor %vm902, %vm903
  %v905 = vsel %vm904, %v897, %v901
  %v906 = vand.u32 2147483647, %v896
  %vm907 = vcmp.eq.f32.partialorder %v906, 8.507059e+37
  %v908 = vand.u32 %v896, 2147483648
  %v909 = vor.u32 1.1754944e-38, %v908
  %v910 = vsel %vm907, %v909, %v905
  %v911 = vmul.f32 1.0, %v910
  %v912 = vmul.f32 %v891, %v833
  %v913 = vmul.f32 %v891, %v892
  %915 = vrot.lane.b32.xlu0 %v913, 64
  %v916 = vpop.permute.xlu0 %915
  %v918 = vadd.f32 %v912, %v916
  %v919 = vtanh.pop %v918
  %v920 = vmul.f32 %v911, %v919
  %922 = vrot.lane.b32.xlu0 %v313, 64
  %v923 = vpop.permute.xlu0 %922
  %926 = vrot.lane.b32.xlu0 %v920, 64
  %v927 = vpop.permute.xlu0 %926
  %v929 = vsel %vm62, %v923, %v927
  %931 = vrot.lane.b32.xlu0 %v402, 64
  %v932 = vpop.permute.xlu0 %931
  %935 = vrot.lane.b32.xlu0 %v835, 64
  %v936 = vpop.permute.xlu0 %935
  %v938 = vsel %vm62, %v932, %v936
  %940 = vrot.lane.b32.xlu0 %v491, 64
  %v941 = vpop.permute.xlu0 %940
  %944 = vrot.lane.b32.xlu0 %v750, 64
  %v945 = vpop.permute.xlu0 %944
  %v947 = vsel %vm62, %v941, %v945
  %949 = vrot.lane.b32.xlu0 %v580, 64
  %v950 = vpop.permute.xlu0 %949
  %953 = vrot.lane.b32.xlu0 %v665, 64
  %v954 = vpop.permute.xlu0 %953
  %v956 = vsel %vm62, %v950, %v954
  %v957 = vsel %vm62, %v954, %v950
  %v958 = vsel %vm62, %v945, %v941
  %v959 = vsel %vm62, %v936, %v932
  %v960 = vsel %vm62, %v927, %v923
  %v961 = vpack.c.bf16 %v938, %v929
  %v962 = vpack.c.bf16 %v956, %v947
  %v963 = vpack.c.bf16 %v958, %v957
  %v964 = vpack.c.bf16 %v960, %v959
  %v965 = vld [vmem:[%s4] sm:$0xff]
  %v966 = vld [vmem:[%s4 + $0x8] sm:$0xff]
  %v967 = vld [vmem:[%s4 + $0x10] sm:$0xff]
  %v968 = vld [vmem:[%s4 + $0x18] sm:$0xff]
  %v969 = vld [vmem:[%s4 + $0x20] sm:$0xff]
  %v970 = vld [vmem:[%s4 + $0x28] sm:$0xff]
  %v971 = vld [vmem:[%s4 + $0x30] sm:$0xff]
  %v972 = vld [vmem:[%s4 + $0x38] sm:$0xff]
  %v973 = vld [vmem:[%s6] sm:$0x3]
  %v975 = vperm.slane %v973, 0
  %v976 = vperm.slane %v973, 1
  %v987 = vunpack.c.l.b16 %v965
  %v988 = vunpack.c.h.b16 %v965
  %v989 = vunpack.c.l.b16 %v966
  %v990 = vunpack.c.h.b16 %v966
  %v991 = vunpack.c.l.b16 %v967
  %v992 = vunpack.c.h.b16 %v967
  %v993 = vunpack.c.l.b16 %v968
  %v994 = vunpack.c.h.b16 %v968
  %v995 = vunpack.c.l.b16 %v969
  %v996 = vunpack.c.h.b16 %v969
  %v997 = vunpack.c.l.b16 %v970
  %v998 = vunpack.c.h.b16 %v970
  %v999 = vunpack.c.l.b16 %v971
  %v1000 = vunpack.c.h.b16 %v971
  %v1001 = vunpack.c.l.b16 %v972
  %v1002 = vunpack.c.h.b16 %v972
  %v1003 = vpack.c.b16 %v989, %v987
  %v1004 = vpack.c.b16 %v990, %v988
  %v1005 = vpack.c.b16 %v993, %v991
  %v1006 = vpack.c.b16 %v994, %v992
  %v1007 = vpack.c.b16 %v997, %v995
  %v1008 = vpack.c.b16 %v998, %v996
  %v1009 = vpack.c.b16 %v1001, %v999
  %v1010 = vpack.c.b16 %v1002, %v1000
  %v1020 = vsel %vm234, %v961, 0
  %v1023 = vsel %vm234, %v962, 0
  %v1026 = vsel %vm234, %v963, 0
  %v1029 = vsel %vm234, %v964, 0
  %1031 = vmatpush.bf16.msra.mxu0 0
  %1032 = vmatpush.bf16.msra.mxu0 0
  %1033 = vmatpush.bf16.msra.mxu0 0
  %1034 = vmatpush.bf16.msra.mxu0 0
  %1035 = vmatpush.bf16.msra.mxu0 %v1009
  %1036 = vmatpush.bf16.msra.mxu0 %v1007
  %1037 = vmatpush.bf16.msra.mxu0 %v1005
  %1038 = vmatpush.bf16.msra.mxu0 %v1003
  %1039 = vmatmul.bf16.gmra.mxu0 %v1020
  %v1040 = vpop.f32.mrf.mxu0
  %v1041 = vadd.f32 %v975, %v1040
  %v1042 = vpop.f32.mrf.mxu0
  %v1043 = vadd.f32 %v975, %v1042
  %1044 = vmatmul.bf16.gmra.mxu0 %v1023
  %v1045 = vpop.f32.mrf.mxu0
  %v1046 = vadd.f32 %v975, %v1045
  %v1047 = vpop.f32.mrf.mxu0
  %v1048 = vadd.f32 %v975, %v1047
  %1049 = vmatmul.bf16.gmra.mxu0 %v1026
  %v1050 = vpop.f32.mrf.mxu0
  %v1051 = vadd.f32 %v975, %v1050
  %v1052 = vpop.f32.mrf.mxu0
  %v1053 = vadd.f32 %v975, %v1052
  %1054 = vmatmul.bf16.gmra.mxu0 %v1029
  %v1055 = vpop.f32.mrf.mxu0
  %v1056 = vadd.f32 %v975, %v1055
  %v1057 = vpop.f32.mrf.mxu0
  %v1058 = vadd.f32 %v975, %v1057
  %1059 = vdwg.mxu0
  %1060 = vmatpush.bf16.msra.mxu0 0
  %1061 = vmatpush.bf16.msra.mxu0 0
  %1062 = vmatpush.bf16.msra.mxu0 0
  %1063 = vmatpush.bf16.msra.mxu0 0
  %1064 = vmatpush.bf16.msra.mxu0 %v1010
  %1065 = vmatpush.bf16.msra.mxu0 %v1008
  %1066 = vmatpush.bf16.msra.mxu0 %v1006
  %1067 = vmatpush.bf16.msra.mxu0 %v1004
  %1068 = vmatmul.bf16.gmra.mxu0 %v1020
  %v1069 = vpop.f32.mrf.mxu0
  %v1070 = vadd.f32 %v976, %v1069
  %v1071 = vpop.f32.mrf.mxu0
  %v1072 = vadd.f32 %v976, %v1071
  %1073 = vmatmul.bf16.gmra.mxu0 %v1023
  %v1074 = vpop.f32.mrf.mxu0
  %v1075 = vadd.f32 %v976, %v1074
  %v1076 = vpop.f32.mrf.mxu0
  %v1077 = vadd.f32 %v976, %v1076
  %1078 = vmatmul.bf16.gmra.mxu0 %v1026
  %v1079 = vpop.f32.mrf.mxu0
  %v1080 = vadd.f32 %v976, %v1079
  %v1081 = vpop.f32.mrf.mxu0
  %v1082 = vadd.f32 %v976, %v1081
  %1083 = vmatmul.bf16.gmra.mxu0 %v1029
  %v1084 = vpop.f32.mrf.mxu0
  %v1085 = vadd.f32 %v976, %v1084
  %v1086 = vpop.f32.mrf.mxu0
  %v1087 = vadd.f32 %v976, %v1086
  %1088 = vdwg.mxu0
  %1089 = vst [vmem:[#allocation2] sm:$0xff] %v1041
  %1090 = vst [vmem:[#allocation2 + $0x8] sm:$0xff] %v1070
  %1091 = vst [vmem:[#allocation2 + $0x10] sm:$0xff] %v1043
  %1092 = vst [vmem:[#allocation2 + $0x18] sm:$0xff] %v1072
  %1093 = vst [vmem:[#allocation2 + $0x20] sm:$0xff] %v1046
  %1094 = vst [vmem:[#allocation2 + $0x28] sm:$0xff] %v1075
  %1095 = vst [vmem:[#allocation2 + $0x30] sm:$0xff] %v1048
  %1096 = vst [vmem:[#allocation2 + $0x38] sm:$0xff] %v1077
  %1097 = vst [vmem:[#allocation2 + $0x40] sm:$0xff] %v1051
  %1098 = vst [vmem:[#allocation2 + $0x48] sm:$0xff] %v1080
  %1099 = vst [vmem:[#allocation2 + $0x50] sm:$0xff] %v1053
  %1100 = vst [vmem:[#allocation2 + $0x58] sm:$0xff] %v1082
  %1101 = vst [vmem:[#allocation2 + $0x60] sm:$0xff] %v1056
  %1102 = vst [vmem:[#allocation2 + $0x68] sm:$0xff] %v1085
  %1103 = vst [vmem:[#allocation2 + $0x70] sm:$0xff] %v1058
  %1104 = vst [vmem:[#allocation2 + $0x78] sm:$0xff] %v1087
  %v1105 = vld [vmem:[%s5] sm:$0xff]
  %v1106 = vld [vmem:[%s5 + $0x8] sm:$0xff]
  %v1107 = vld [vmem:[%s5 + $0x10] sm:$0xff]
  %v1108 = vld [vmem:[%s5 + $0x18] sm:$0xff]
  %v1109 = vld [vmem:[%s5 + $0x20] sm:$0xff]
  %v1110 = vld [vmem:[%s5 + $0x28] sm:$0xff]
  %v1111 = vld [vmem:[%s5 + $0x30] sm:$0xff]
  %v1112 = vld [vmem:[%s5 + $0x38] sm:$0xff]
  %v1113 = vld [vmem:[#allocation2] sm:$0xff]
  %v1114 = vld [vmem:[#allocation2 + $0x8] sm:$0xff]
  %v1115 = vld [vmem:[#allocation2 + $0x70] sm:$0xff]
  %v1116 = vld [vmem:[#allocation2 + $0x78] sm:$0xff]
  %v1117 = vsel %vm60, %v1113, %v1115
  %v1118 = vsel %vm61, %v1114, %v1116
  %v1127 = vunpack.c.l.b16 %v1105
  %v1128 = vunpack.c.h.b16 %v1105
  %v1129 = vunpack.c.l.b16 %v1106
  %v1130 = vunpack.c.h.b16 %v1106
  %v1131 = vunpack.c.l.b16 %v1107
  %v1132 = vunpack.c.h.b16 %v1107
  %v1133 = vunpack.c.l.b16 %v1108
  %v1134 = vunpack.c.h.b16 %v1108
  %v1135 = vunpack.c.l.b16 %v1109
  %v1136 = vunpack.c.h.b16 %v1109
  %v1137 = vunpack.c.l.b16 %v1110
  %v1138 = vunpack.c.h.b16 %v1110
  %v1139 = vunpack.c.l.b16 %v1111
  %v1140 = vunpack.c.h.b16 %v1111
  %v1141 = vunpack.c.l.b16 %v1112
  %v1142 = vunpack.c.h.b16 %v1112
  %v1143 = vpack.c.b16 %v1129, %v1127
  %v1144 = vpack.c.b16 %v1130, %v1128
  %v1145 = vpack.c.b16 %v1133, %v1131
  %v1146 = vpack.c.b16 %v1134, %v1132
  %v1147 = vpack.c.b16 %v1137, %v1135
  %v1148 = vpack.c.b16 %v1138, %v1136
  %v1149 = vpack.c.b16 %v1141, %v1139
  %v1150 = vpack.c.b16 %v1142, %v1140
  %1159 = vmatpush.bf16.msra.mxu0 0
  %1160 = vmatpush.bf16.msra.mxu0 0
  %1161 = vmatpush.bf16.msra.mxu0 0
  %1162 = vmatpush.bf16.msra.mxu0 0
  %1163 = vmatpush.bf16.msra.mxu0 %v1149
  %1164 = vmatpush.bf16.msra.mxu0 %v1147
  %1165 = vmatpush.bf16.msra.mxu0 %v1145
  %1166 = vmatpush.bf16.msra.mxu0 %v1143
  %1167 = vmatmul.bf16.gmra.mxu0 %v236
  %v1168 = vpop.f32.mrf.mxu0
  %v1169 = vadd.f32 0.0, %v1168
  %v1170 = vpop.f32.mrf.mxu0
  %1171 = vdwg.mxu0
  %1172 = vmatpush.bf16.msra.mxu0 0
  %1173 = vmatpush.bf16.msra.mxu0 0
  %1174 = vmatpush.bf16.msra.mxu0 0
  %1175 = vmatpush.bf16.msra.mxu0 0
  %1176 = vmatpush.bf16.msra.mxu0 %v1150
  %1177 = vmatpush.bf16.msra.mxu0 %v1148
  %1178 = vmatpush.bf16.msra.mxu0 %v1146
  %1179 = vmatpush.bf16.msra.mxu0 %v1144
  %1180 = vmatmul.bf16.gmra.mxu0 %v236
  %v1181 = vpop.f32.mrf.mxu0
  %v1182 = vadd.f32 0.0, %v1181
  %v1183 = vpop.f32.mrf.mxu0
  %1184 = vdwg.mxu0
  %v1185 = vadd.f32 %v1117, %v1169
  %v1186 = vadd.f32 %v1118, %v1182
  %v1187 = vxor.u32 %v1185, 2147483648
  %v1188 = vmul.f32 %v1187, 1.442695
  %v1189 = vpow.pop %v1188
  %v1190 = vadd.f32 %v1189, 1.0
  %v1191 = vrcp.pop %v1190
  %v1192 = vmul.f32 %v1190, %v1191
  %v1193 = vsub.f32 1.0, %v1192
  %v1194 = vmul.f32 %v1191, %v1193
  %v1195 = vadd.f32 %v1191, %v1194
  %vm1196 = vweird.f32 %v1190
  %vm1197 = vweird.f32 %v1191
  %vm1198 = vmor %vm1196, %vm1197
  %v1199 = vsel %vm1198, %v1191, %v1195
  %v1200 = vand.u32 2147483647, %v1190
  %vm1201 = vcmp.eq.f32.partialorder %v1200, 8.507059e+37
  %v1202 = vand.u32 %v1190, 2147483648
  %v1203 = vor.u32 1.1754944e-38, %v1202
  %v1204 = vsel %vm1201, %v1203, %v1199
  %v1205 = vmul.f32 1.0, %v1204
  %v1206 = vtanh.pop %v1186
  %v1207 = vxor.u32 %v1186, 2147483648
  %v1208 = vmul.f32 %v1207, 1.442695
  %v1209 = vpow.pop %v1208
  %v1210 = vadd.f32 %v1209, 1.0
  %v1211 = vrcp.pop %v1210
  %v1212 = vmul.f32 %v1210, %v1211
  %v1213 = vsub.f32 1.0, %v1212
  %v1214 = vmul.f32 %v1211, %v1213
  %v1215 = vadd.f32 %v1211, %v1214
  %vm1216 = vweird.f32 %v1210
  %vm1217 = vweird.f32 %v1211
  %vm1218 = vmor %vm1216, %vm1217
  %v1219 = vsel %vm1218, %v1211, %v1215
  %v1220 = vand.u32 2147483647, %v1210
  %vm1221 = vcmp.eq.f32.partialorder %v1220, 8.507059e+37
  %v1222 = vand.u32 %v1210, 2147483648
  %v1223 = vor.u32 1.1754944e-38, %v1222
  %v1224 = vsel %vm1221, %v1223, %v1219
  %v1225 = vmul.f32 1.0, %v1224
  %v1226 = vmul.f32 %v1205, 0.0
  %v1227 = vmul.f32 %v1205, %v1206
  %1229 = vrot.lane.b32.xlu0 %v1227, 64
  %v1230 = vpop.permute.xlu0 %1229
  %v1232 = vadd.f32 %v1226, %v1230
  %v1233 = vtanh.pop %v1232
  %v1234 = vmul.f32 %v1225, %v1233
  %v1235 = vld [vmem:[#allocation2 + $0x10] sm:$0xff]
  %v1236 = vld [vmem:[#allocation2 + $0x18] sm:$0xff]
  %v1237 = vld [vmem:[#allocation2 + $0x60] sm:$0xff]
  %v1238 = vld [vmem:[#allocation2 + $0x68] sm:$0xff]
  %v1239 = vsel %vm60, %v1235, %v1237
  %v1240 = vsel %vm61, %v1236, %v1238
  %v1241 = vpack.c.bf16 %v1234, %v1234
  %1243 = vrot.lane.b32.xlu0 %v1241, 64
  %v1244 = vpop.permute.xlu0 %1243
  %v1246 = vsel %vm234, %v1244, 0
  %1248 = vmatpush.bf16.msra.mxu0 0
  %1249 = vmatpush.bf16.msra.mxu0 0
  %1250 = vmatpush.bf16.msra.mxu0 0
  %1251 = vmatpush.bf16.msra.mxu0 0
  %1252 = vmatpush.bf16.msra.mxu0 %v1149
  %1253 = vmatpush.bf16.msra.mxu0 %v1147
  %1254 = vmatpush.bf16.msra.mxu0 %v1145
  %1255 = vmatpush.bf16.msra.mxu0 %v1143
  %1256 = vmatmul.bf16.gmra.mxu0 %v1246
  %v1257 = vpop.f32.mrf.mxu0
  %v1258 = vadd.f32 0.0, %v1257
  %v1259 = vpop.f32.mrf.mxu0
  %1260 = vdwg.mxu0
  %1261 = vmatpush.bf16.msra.mxu0 0
  %1262 = vmatpush.bf16.msra.mxu0 0
  %1263 = vmatpush.bf16.msra.mxu0 0
  %1264 = vmatpush.bf16.msra.mxu0 0
  %1265 = vmatpush.bf16.msra.mxu0 %v1150
  %1266 = vmatpush.bf16.msra.mxu0 %v1148
  %1267 = vmatpush.bf16.msra.mxu0 %v1146
  %1268 = vmatpush.bf16.msra.mxu0 %v1144
  %1269 = vmatmul.bf16.gmra.mxu0 %v1246
  %v1270 = vpop.f32.mrf.mxu0
  %v1271 = vadd.f32 0.0, %v1270
  %v1272 = vpop.f32.mrf.mxu0
  %1273 = vdwg.mxu0
  %v1274 = vadd.f32 %v1239, %v1258
  %v1275 = vadd.f32 %v1240, %v1271
  %v1276 = vxor.u32 %v1274, 2147483648
  %v1277 = vmul.f32 %v1276, 1.442695
  %v1278 = vpow.pop %v1277
  %v1279 = vadd.f32 %v1278, 1.0
  %v1280 = vrcp.pop %v1279
  %v1281 = vmul.f32 %v1279, %v1280
  %v1282 = vsub.f32 1.0, %v1281
  %v1283 = vmul.f32 %v1280, %v1282
  %v1284 = vadd.f32 %v1280, %v1283
  %vm1285 = vweird.f32 %v1279
  %vm1286 = vweird.f32 %v1280
  %vm1287 = vmor %vm1285, %vm1286
  %v1288 = vsel %vm1287, %v1280, %v1284
  %v1289 = vand.u32 2147483647, %v1279
  %vm1290 = vcmp.eq.f32.partialorder %v1289, 8.507059e+37
  %v1291 = vand.u32 %v1279, 2147483648
  %v1292 = vor.u32 1.1754944e-38, %v1291
  %v1293 = vsel %vm1290, %v1292, %v1288
  %v1294 = vmul.f32 1.0, %v1293
  %v1295 = vtanh.pop %v1275
  %v1296 = vxor.u32 %v1275, 2147483648
  %v1297 = vmul.f32 %v1296, 1.442695
  %v1298 = vpow.pop %v1297
  %v1299 = vadd.f32 %v1298, 1.0
  %v1300 = vrcp.pop %v1299
  %v1301 = vmul.f32 %v1299, %v1300
  %v1302 = vsub.f32 1.0, %v1301
  %v1303 = vmul.f32 %v1300, %v1302
  %v1304 = vadd.f32 %v1300, %v1303
  %vm1305 = vweird.f32 %v1299
  %vm1306 = vweird.f32 %v1300
  %vm1307 = vmor %vm1305, %vm1306
  %v1308 = vsel %vm1307, %v1300, %v1304
  %v1309 = vand.u32 2147483647, %v1299
  %vm1310 = vcmp.eq.f32.partialorder %v1309, 8.507059e+37
  %v1311 = vand.u32 %v1299, 2147483648
  %v1312 = vor.u32 1.1754944e-38, %v1311
  %v1313 = vsel %vm1310, %v1312, %v1308
  %v1314 = vmul.f32 1.0, %v1313
  %v1315 = vmul.f32 %v1294, %v1232
  %v1316 = vmul.f32 %v1294, %v1295
  %1318 = vrot.lane.b32.xlu0 %v1316, 64
  %v1319 = vpop.permute.xlu0 %1318
  %v1321 = vadd.f32 %v1315, %v1319
  %v1322 = vtanh.pop %v1321
  %v1323 = vmul.f32 %v1314, %v1322
  %v1324 = vld [vmem:[#allocation2 + $0x20] sm:$0xff]
  %v1325 = vld [vmem:[#allocation2 + $0x28] sm:$0xff]
  %v1326 = vld [vmem:[#allocation2 + $0x50] sm:$0xff]
  %v1327 = vld [vmem:[#allocation2 + $0x58] sm:$0xff]
  %v1328 = vsel %vm60, %v1324, %v1326
  %v1329 = vsel %vm61, %v1325, %v1327
  %v1330 = vpack.c.bf16 %v1323, %v1323
  %1332 = vrot.lane.b32.xlu0 %v1330, 64
  %v1333 = vpop.permute.xlu0 %1332
  %v1335 = vsel %vm234, %v1333, 0
  %1337 = vmatpush.bf16.msra.mxu0 0
  %1338 = vmatpush.bf16.msra.mxu0 0
  %1339 = vmatpush.bf16.msra.mxu0 0
  %1340 = vmatpush.bf16.msra.mxu0 0
  %1341 = vmatpush.bf16.msra.mxu0 %v1149
  %1342 = vmatpush.bf16.msra.mxu0 %v1147
  %1343 = vmatpush.bf16.msra.mxu0 %v1145
  %1344 = vmatpush.bf16.msra.mxu0 %v1143
  %1345 = vmatmul.bf16.gmra.mxu0 %v1335
  %v1346 = vpop.f32.mrf.mxu0
  %v1347 = vadd.f32 0.0, %v1346
  %v1348 = vpop.f32.mrf.mxu0
  %1349 = vdwg.mxu0
  %1350 = vmatpush.bf16.msra.mxu0 0
  %1351 = vmatpush.bf16.msra.mxu0 0
  %1352 = vmatpush.bf16.msra.mxu0 0
  %1353 = vmatpush.bf16.msra.mxu0 0
  %1354 = vmatpush.bf16.msra.mxu0 %v1150
  %1355 = vmatpush.bf16.msra.mxu0 %v1148
  %1356 = vmatpush.bf16.msra.mxu0 %v1146
  %1357 = vmatpush.bf16.msra.mxu0 %v1144
  %1358 = vmatmul.bf16.gmra.mxu0 %v1335
  %v1359 = vpop.f32.mrf.mxu0
  %v1360 = vadd.f32 0.0, %v1359
  %v1361 = vpop.f32.mrf.mxu0
  %1362 = vdwg.mxu0
  %v1363 = vadd.f32 %v1328, %v1347
  %v1364 = vadd.f32 %v1329, %v1360
  %v1365 = vxor.u32 %v1363, 2147483648
  %v1366 = vmul.f32 %v1365, 1.442695
  %v1367 = vpow.pop %v1366
  %v1368 = vadd.f32 %v1367, 1.0
  %v1369 = vrcp.pop %v1368
  %v1370 = vmul.f32 %v1368, %v1369
  %v1371 = vsub.f32 1.0, %v1370
  %v1372 = vmul.f32 %v1369, %v1371
  %v1373 = vadd.f32 %v1369, %v1372
  %vm1374 = vweird.f32 %v1368
  %vm1375 = vweird.f32 %v1369
  %vm1376 = vmor %vm1374, %vm1375
  %v1377 = vsel %vm1376, %v1369, %v1373
  %v1378 = vand.u32 2147483647, %v1368
  %vm1379 = vcmp.eq.f32.partialorder %v1378, 8.507059e+37
  %v1380 = vand.u32 %v1368, 2147483648
  %v1381 = vor.u32 1.1754944e-38, %v1380
  %v1382 = vsel %vm1379, %v1381, %v1377
  %v1383 = vmul.f32 1.0, %v1382
  %v1384 = vtanh.pop %v1364
  %v1385 = vxor.u32 %v1364, 2147483648
  %v1386 = vmul.f32 %v1385, 1.442695
  %v1387 = vpow.pop %v1386
  %v1388 = vadd.f32 %v1387, 1.0
  %v1389 = vrcp.pop %v1388
  %v1390 = vmul.f32 %v1388, %v1389
  %v1391 = vsub.f32 1.0, %v1390
  %v1392 = vmul.f32 %v1389, %v1391
  %v1393 = vadd.f32 %v1389, %v1392
  %vm1394 = vweird.f32 %v1388
  %vm1395 = vweird.f32 %v1389
  %vm1396 = vmor %vm1394, %vm1395
  %v1397 = vsel %vm1396, %v1389, %v1393
  %v1398 = vand.u32 2147483647, %v1388
  %vm1399 = vcmp.eq.f32.partialorder %v1398, 8.507059e+37
  %v1400 = vand.u32 %v1388, 2147483648
  %v1401 = vor.u32 1.1754944e-38, %v1400
  %v1402 = vsel %vm1399, %v1401, %v1397
  %v1403 = vmul.f32 1.0, %v1402
  %v1404 = vmul.f32 %v1383, %v1321
  %v1405 = vmul.f32 %v1383, %v1384
  %1407 = vrot.lane.b32.xlu0 %v1405, 64
  %v1408 = vpop.permute.xlu0 %1407
  %v1410 = vadd.f32 %v1404, %v1408
  %v1411 = vtanh.pop %v1410
  %v1412 = vmul.f32 %v1403, %v1411
  %v1413 = vld [vmem:[#allocation2 + $0x30] sm:$0xff]
  %v1414 = vld [vmem:[#allocation2 + $0x38] sm:$0xff]
  %v1415 = vld [vmem:[#allocation2 + $0x40] sm:$0xff]
  %v1416 = vld [vmem:[#allocation2 + $0x48] sm:$0xff]
  %v1417 = vsel %vm60, %v1413, %v1415
  %v1418 = vsel %vm61, %v1414, %v1416
  %v1419 = vpack.c.bf16 %v1412, %v1412
  %1421 = vrot.lane.b32.xlu0 %v1419, 64
  %v1422 = vpop.permute.xlu0 %1421
  %v1424 = vsel %vm234, %v1422, 0
  %1426 = vmatpush.bf16.msra.mxu0 0
  %1427 = vmatpush.bf16.msra.mxu0 0
  %1428 = vmatpush.bf16.msra.mxu0 0
  %1429 = vmatpush.bf16.msra.mxu0 0
  %1430 = vmatpush.bf16.msra.mxu0 %v1149
  %1431 = vmatpush.bf16.msra.mxu0 %v1147
  %1432 = vmatpush.bf16.msra.mxu0 %v1145
  %1433 = vmatpush.bf16.msra.mxu0 %v1143
  %1434 = vmatmul.bf16.gmra.mxu0 %v1424
  %v1435 = vpop.f32.mrf.mxu0
  %v1436 = vadd.f32 0.0, %v1435
  %v1437 = vpop.f32.mrf.mxu0
  %1438 = vdwg.mxu0
  %1439 = vmatpush.bf16.msra.mxu0 0
  %1440 = vmatpush.bf16.msra.mxu0 0
  %1441 = vmatpush.bf16.msra.mxu0 0
  %1442 = vmatpush.bf16.msra.mxu0 0
  %1443 = vmatpush.bf16.msra.mxu0 %v1150
  %1444 = vmatpush.bf16.msra.mxu0 %v1148
  %1445 = vmatpush.bf16.msra.mxu0 %v1146
  %1446 = vmatpush.bf16.msra.mxu0 %v1144
  %1447 = vmatmul.bf16.gmra.mxu0 %v1424
  %v1448 = vpop.f32.mrf.mxu0
  %v1449 = vadd.f32 0.0, %v1448
  %v1450 = vpop.f32.mrf.mxu0
  %1451 = vdwg.mxu0
  %v1452 = vadd.f32 %v1417, %v1436
  %v1453 = vadd.f32 %v1418, %v1449
  %v1454 = vxor.u32 %v1452, 2147483648
  %v1455 = vmul.f32 %v1454, 1.442695
  %v1456 = vpow.pop %v1455
  %v1457 = vadd.f32 %v1456, 1.0
  %v1458 = vrcp.pop %v1457
  %v1459 = vmul.f32 %v1457, %v1458
  %v1460 = vsub.f32 1.0, %v1459
  %v1461 = vmul.f32 %v1458, %v1460
  %v1462 = vadd.f32 %v1458, %v1461
  %vm1463 = vweird.f32 %v1457
  %vm1464 = vweird.f32 %v1458
  %vm1465 = vmor %vm1463, %vm1464
  %v1466 = vsel %vm1465, %v1458, %v1462
  %v1467 = vand.u32 2147483647, %v1457
  %vm1468 = vcmp.eq.f32.partialorder %v1467, 8.507059e+37
  %v1469 = vand.u32 %v1457, 2147483648
  %v1470 = vor.u32 1.1754944e-38, %v1469
  %v1471 = vsel %vm1468, %v1470, %v1466
  %v1472 = vmul.f32 1.0, %v1471
  %v1473 = vtanh.pop %v1453
  %v1474 = vxor.u32 %v1453, 2147483648
  %v1475 = vmul.f32 %v1474, 1.442695
  %v1476 = vpow.pop %v1475
  %v1477 = vadd.f32 %v1476, 1.0
  %v1478 = vrcp.pop %v1477
  %v1479 = vmul.f32 %v1477, %v1478
  %v1480 = vsub.f32 1.0, %v1479
  %v1481 = vmul.f32 %v1478, %v1480
  %v1482 = vadd.f32 %v1478, %v1481
  %vm1483 = vweird.f32 %v1477
  %vm1484 = vweird.f32 %v1478
  %vm1485 = vmor %vm1483, %vm1484
  %v1486 = vsel %vm1485, %v1478, %v1482
  %v1487 = vand.u32 2147483647, %v1477
  %vm1488 = vcmp.eq.f32.partialorder %v1487, 8.507059e+37
  %v1489 = vand.u32 %v1477, 2147483648
  %v1490 = vor.u32 1.1754944e-38, %v1489
  %v1491 = vsel %vm1488, %v1490, %v1486
  %v1492 = vmul.f32 1.0, %v1491
  %v1493 = vmul.f32 %v1472, %v1410
  %v1494 = vmul.f32 %v1472, %v1473
  %1496 = vrot.lane.b32.xlu0 %v1494, 64
  %v1497 = vpop.permute.xlu0 %1496
  %v1499 = vadd.f32 %v1493, %v1497
  %v1500 = vtanh.pop %v1499
  %v1501 = vmul.f32 %v1492, %v1500
  %v1502 = vsel %vm60, %v1415, %v1413
  %v1503 = vsel %vm61, %v1416, %v1414
  %v1504 = vpack.c.bf16 %v1501, %v1501
  %1506 = vrot.lane.b32.xlu0 %v1504, 64
  %v1507 = vpop.permute.xlu0 %1506
  %v1509 = vsel %vm234, %v1507, 0
  %1511 = vmatpush.bf16.msra.mxu0 0
  %1512 = vmatpush.bf16.msra.mxu0 0
  %1513 = vmatpush.bf16.msra.mxu0 0
  %1514 = vmatpush.bf16.msra.mxu0 0
  %1515 = vmatpush.bf16.msra.mxu0 %v1149
  %1516 = vmatpush.bf16.msra.mxu0 %v1147
  %1517 = vmatpush.bf16.msra.mxu0 %v1145
  %1518 = vmatpush.bf16.msra.mxu0 %v1143
  %1519 = vmatmul.bf16.gmra.mxu0 %v1509
  %v1520 = vpop.f32.mrf.mxu0
  %v1521 = vadd.f32 0.0, %v1520
  %v1522 = vpop.f32.mrf.mxu0
  %1523 = vdwg.mxu0
  %1524 = vmatpush.bf16.msra.mxu0 0
  %1525 = vmatpush.bf16.msra.mxu0 0
  %1526 = vmatpush.bf16.msra.mxu0 0
  %1527 = vmatpush.bf16.msra.mxu0 0
  %1528 = vmatpush.bf16.msra.mxu0 %v1150
  %1529 = vmatpush.bf16.msra.mxu0 %v1148
  %1530 = vmatpush.bf16.msra.mxu0 %v1146
  %1531 = vmatpush.bf16.msra.mxu0 %v1144
  %1532 = vmatmul.bf16.gmra.mxu0 %v1509
  %v1533 = vpop.f32.mrf.mxu0
  %v1534 = vadd.f32 0.0, %v1533
  %v1535 = vpop.f32.mrf.mxu0
  %1536 = vdwg.mxu0
  %v1537 = vadd.f32 %v1502, %v1521
  %v1538 = vadd.f32 %v1503, %v1534
  %v1539 = vxor.u32 %v1537, 2147483648
  %v1540 = vmul.f32 %v1539, 1.442695
  %v1541 = vpow.pop %v1540
  %v1542 = vadd.f32 %v1541, 1.0
  %v1543 = vrcp.pop %v1542
  %v1544 = vmul.f32 %v1542, %v1543
  %v1545 = vsub.f32 1.0, %v1544
  %v1546 = vmul.f32 %v1543, %v1545
  %v1547 = vadd.f32 %v1543, %v1546
  %vm1548 = vweird.f32 %v1542
  %vm1549 = vweird.f32 %v1543
  %vm1550 = vmor %vm1548, %vm1549
  %v1551 = vsel %vm1550, %v1543, %v1547
  %v1552 = vand.u32 2147483647, %v1542
  %vm1553 = vcmp.eq.f32.partialorder %v1552, 8.507059e+37
  %v1554 = vand.u32 %v1542, 2147483648
  %v1555 = vor.u32 1.1754944e-38, %v1554
  %v1556 = vsel %vm1553, %v1555, %v1551
  %v1557 = vmul.f32 1.0, %v1556
  %v1558 = vtanh.pop %v1538
  %v1559 = vxor.u32 %v1538, 2147483648
  %v1560 = vmul.f32 %v1559, 1.442695
  %v1561 = vpow.pop %v1560
  %v1562 = vadd.f32 %v1561, 1.0
  %v1563 = vrcp.pop %v1562
  %v1564 = vmul.f32 %v1562, %v1563
  %v1565 = vsub.f32 1.0, %v1564
  %v1566 = vmul.f32 %v1563, %v1565
  %v1567 = vadd.f32 %v1563, %v1566
  %vm1568 = vweird.f32 %v1562
  %vm1569 = vweird.f32 %v1563
  %vm1570 = vmor %vm1568, %vm1569
  %v1571 = vsel %vm1570, %v1563, %v1567
  %v1572 = vand.u32 2147483647, %v1562
  %vm1573 = vcmp.eq.f32.partialorder %v1572, 8.507059e+37
  %v1574 = vand.u32 %v1562, 2147483648
  %v1575 = vor.u32 1.1754944e-38, %v1574
  %v1576 = vsel %vm1573, %v1575, %v1571
  %v1577 = vmul.f32 1.0, %v1576
  %v1578 = vmul.f32 %v1557, %v1499
  %v1579 = vmul.f32 %v1557, %v1558
  %1581 = vrot.lane.b32.xlu0 %v1579, 64
  %v1582 = vpop.permute.xlu0 %1581
  %v1584 = vadd.f32 %v1578, %v1582
  %v1585 = vtanh.pop %v1584
  %v1586 = vmul.f32 %v1577, %v1585
  %v1587 = vsel %vm60, %v1326, %v1324
  %v1588 = vsel %vm61, %v1327, %v1325
  %v1589 = vpack.c.bf16 %v1586, %v1586
  %1591 = vrot.lane.b32.xlu0 %v1589, 64
  %v1592 = vpop.permute.xlu0 %1591
  %v1594 = vsel %vm234, %v1592, 0
  %1596 = vmatpush.bf16.msra.mxu0 0
  %1597 = vmatpush.bf16.msra.mxu0 0
  %1598 = vmatpush.bf16.msra.mxu0 0
  %1599 = vmatpush.bf16.msra.mxu0 0
  %1600 = vmatpush.bf16.msra.mxu0 %v1149
  %1601 = vmatpush.bf16.msra.mxu0 %v1147
  %1602 = vmatpush.bf16.msra.mxu0 %v1145
  %1603 = vmatpush.bf16.msra.mxu0 %v1143
  %1604 = vmatmul.bf16.gmra.mxu0 %v1594
  %v1605 = vpop.f32.mrf.mxu0
  %v1606 = vadd.f32 0.0, %v1605
  %v1607 = vpop.f32.mrf.mxu0
  %1608 = vdwg.mxu0
  %1609 = vmatpush.bf16.msra.mxu0 0
  %1610 = vmatpush.bf16.msra.mxu0 0
  %1611 = vmatpush.bf16.msra.mxu0 0
  %1612 = vmatpush.bf16.msra.mxu0 0
  %1613 = vmatpush.bf16.msra.mxu0 %v1150
  %1614 = vmatpush.bf16.msra.mxu0 %v1148
  %1615 = vmatpush.bf16.msra.mxu0 %v1146
  %1616 = vmatpush.bf16.msra.mxu0 %v1144
  %1617 = vmatmul.bf16.gmra.mxu0 %v1594
  %v1618 = vpop.f32.mrf.mxu0
  %v1619 = vadd.f32 0.0, %v1618
  %v1620 = vpop.f32.mrf.mxu0
  %1621 = vdwg.mxu0
  %v1622 = vadd.f32 %v1587, %v1606
  %v1623 = vadd.f32 %v1588, %v1619
  %v1624 = vxor.u32 %v1622, 2147483648
  %v1625 = vmul.f32 %v1624, 1.442695
  %v1626 = vpow.pop %v1625
  %v1627 = vadd.f32 %v1626, 1.0
  %v1628 = vrcp.pop %v1627
  %v1629 = vmul.f32 %v1627, %v1628
  %v1630 = vsub.f32 1.0, %v1629
  %v1631 = vmul.f32 %v1628, %v1630
  %v1632 = vadd.f32 %v1628, %v1631
  %vm1633 = vweird.f32 %v1627
  %vm1634 = vweird.f32 %v1628
  %vm1635 = vmor %vm1633, %vm1634
  %v1636 = vsel %vm1635, %v1628, %v1632
  %v1637 = vand.u32 2147483647, %v1627
  %vm1638 = vcmp.eq.f32.partialorder %v1637, 8.507059e+37
  %v1639 = vand.u32 %v1627, 2147483648
  %v1640 = vor.u32 1.1754944e-38, %v1639
  %v1641 = vsel %vm1638, %v1640, %v1636
  %v1642 = vmul.f32 1.0, %v1641
  %v1643 = vtanh.pop %v1623
  %v1644 = vxor.u32 %v1623, 2147483648
  %v1645 = vmul.f32 %v1644, 1.442695
  %v1646 = vpow.pop %v1645
  %v1647 = vadd.f32 %v1646, 1.0
  %v1648 = vrcp.pop %v1647
  %v1649 = vmul.f32 %v1647, %v1648
  %v1650 = vsub.f32 1.0, %v1649
  %v1651 = vmul.f32 %v1648, %v1650
  %v1652 = vadd.f32 %v1648, %v1651
  %vm1653 = vweird.f32 %v1647
  %vm1654 = vweird.f32 %v1648
  %vm1655 = vmor %vm1653, %vm1654
  %v1656 = vsel %vm1655, %v1648, %v1652
  %v1657 = vand.u32 2147483647, %v1647
  %vm1658 = vcmp.eq.f32.partialorder %v1657, 8.507059e+37
  %v1659 = vand.u32 %v1647, 2147483648
  %v1660 = vor.u32 1.1754944e-38, %v1659
  %v1661 = vsel %vm1658, %v1660, %v1656
  %v1662 = vmul.f32 1.0, %v1661
  %v1663 = vmul.f32 %v1642, %v1584
  %v1664 = vmul.f32 %v1642, %v1643
  %1666 = vrot.lane.b32.xlu0 %v1664, 64
  %v1667 = vpop.permute.xlu0 %1666
  %v1669 = vadd.f32 %v1663, %v1667
  %v1670 = vtanh.pop %v1669
  %v1671 = vmul.f32 %v1662, %v1670
  %v1672 = vsel %vm60, %v1237, %v1235
  %v1673 = vsel %vm61, %v1238, %v1236
  %v1674 = vpack.c.bf16 %v1671, %v1671
  %1676 = vrot.lane.b32.xlu0 %v1674, 64
  %v1677 = vpop.permute.xlu0 %1676
  %v1679 = vsel %vm234, %v1677, 0
  %1681 = vmatpush.bf16.msra.mxu0 0
  %1682 = vmatpush.bf16.msra.mxu0 0
  %1683 = vmatpush.bf16.msra.mxu0 0
  %1684 = vmatpush.bf16.msra.mxu0 0
  %1685 = vmatpush.bf16.msra.mxu0 %v1149
  %1686 = vmatpush.bf16.msra.mxu0 %v1147
  %1687 = vmatpush.bf16.msra.mxu0 %v1145
  %1688 = vmatpush.bf16.msra.mxu0 %v1143
  %1689 = vmatmul.bf16.gmra.mxu0 %v1679
  %v1690 = vpop.f32.mrf.mxu0
  %v1691 = vadd.f32 0.0, %v1690
  %v1692 = vpop.f32.mrf.mxu0
  %1693 = vdwg.mxu0
  %1694 = vmatpush.bf16.msra.mxu0 0
  %1695 = vmatpush.bf16.msra.mxu0 0
  %1696 = vmatpush.bf16.msra.mxu0 0
  %1697 = vmatpush.bf16.msra.mxu0 0
  %1698 = vmatpush.bf16.msra.mxu0 %v1150
  %1699 = vmatpush.bf16.msra.mxu0 %v1148
  %1700 = vmatpush.bf16.msra.mxu0 %v1146
  %1701 = vmatpush.bf16.msra.mxu0 %v1144
  %1702 = vmatmul.bf16.gmra.mxu0 %v1679
  %v1703 = vpop.f32.mrf.mxu0
  %v1704 = vadd.f32 0.0, %v1703
  %v1705 = vpop.f32.mrf.mxu0
  %1706 = vdwg.mxu0
  %v1707 = vadd.f32 %v1672, %v1691
  %v1708 = vadd.f32 %v1673, %v1704
  %v1709 = vxor.u32 %v1707, 2147483648
  %v1710 = vmul.f32 %v1709, 1.442695
  %v1711 = vpow.pop %v1710
  %v1712 = vadd.f32 %v1711, 1.0
  %v1713 = vrcp.pop %v1712
  %v1714 = vmul.f32 %v1712, %v1713
  %v1715 = vsub.f32 1.0, %v1714
  %v1716 = vmul.f32 %v1713, %v1715
  %v1717 = vadd.f32 %v1713, %v1716
  %vm1718 = vweird.f32 %v1712
  %vm1719 = vweird.f32 %v1713
  %vm1720 = vmor %vm1718, %vm1719
  %v1721 = vsel %vm1720, %v1713, %v1717
  %v1722 = vand.u32 2147483647, %v1712
  %vm1723 = vcmp.eq.f32.partialorder %v1722, 8.507059e+37
  %v1724 = vand.u32 %v1712, 2147483648
  %v1725 = vor.u32 1.1754944e-38, %v1724
  %v1726 = vsel %vm1723, %v1725, %v1721
  %v1727 = vmul.f32 1.0, %v1726
  %v1728 = vtanh.pop %v1708
  %v1729 = vxor.u32 %v1708, 2147483648
  %v1730 = vmul.f32 %v1729, 1.442695
  %v1731 = vpow.pop %v1730
  %v1732 = vadd.f32 %v1731, 1.0
  %v1733 = vrcp.pop %v1732
  %v1734 = vmul.f32 %v1732, %v1733
  %v1735 = vsub.f32 1.0, %v1734
  %v1736 = vmul.f32 %v1733, %v1735
  %v1737 = vadd.f32 %v1733, %v1736
  %vm1738 = vweird.f32 %v1732
  %vm1739 = vweird.f32 %v1733
  %vm1740 = vmor %vm1738, %vm1739
  %v1741 = vsel %vm1740, %v1733, %v1737
  %v1742 = vand.u32 2147483647, %v1732
  %vm1743 = vcmp.eq.f32.partialorder %v1742, 8.507059e+37
  %v1744 = vand.u32 %v1732, 2147483648
  %v1745 = vor.u32 1.1754944e-38, %v1744
  %v1746 = vsel %vm1743, %v1745, %v1741
  %v1747 = vmul.f32 1.0, %v1746
  %v1748 = vmul.f32 %v1727, %v1669
  %v1749 = vmul.f32 %v1727, %v1728
  %1751 = vrot.lane.b32.xlu0 %v1749, 64
  %v1752 = vpop.permute.xlu0 %1751
  %v1754 = vadd.f32 %v1748, %v1752
  %v1755 = vtanh.pop %v1754
  %v1756 = vmul.f32 %v1747, %v1755
  %v1757 = vsel %vm60, %v1115, %v1113
  %v1758 = vsel %vm61, %v1116, %v1114
  %v1759 = vpack.c.bf16 %v1756, %v1756
  %1761 = vrot.lane.b32.xlu0 %v1759, 64
  %v1762 = vpop.permute.xlu0 %1761
  %v1764 = vsel %vm234, %v1762, 0
  %1766 = vmatpush.bf16.msra.mxu0 0
  %1767 = vmatpush.bf16.msra.mxu0 0
  %1768 = vmatpush.bf16.msra.mxu0 0
  %1769 = vmatpush.bf16.msra.mxu0 0
  %1770 = vmatpush.bf16.msra.mxu0 %v1149
  %1771 = vmatpush.bf16.msra.mxu0 %v1147
  %1772 = vmatpush.bf16.msra.mxu0 %v1145
  %1773 = vmatpush.bf16.msra.mxu0 %v1143
  %1774 = vmatmul.bf16.gmra.mxu0 %v1764
  %v1775 = vpop.f32.mrf.mxu0
  %v1776 = vadd.f32 0.0, %v1775
  %v1777 = vpop.f32.mrf.mxu0
  %1778 = vdwg.mxu0
  %1779 = vmatpush.bf16.msra.mxu0 0
  %1780 = vmatpush.bf16.msra.mxu0 0
  %1781 = vmatpush.bf16.msra.mxu0 0
  %1782 = vmatpush.bf16.msra.mxu0 0
  %1783 = vmatpush.bf16.msra.mxu0 %v1150
  %1784 = vmatpush.bf16.msra.mxu0 %v1148
  %1785 = vmatpush.bf16.msra.mxu0 %v1146
  %1786 = vmatpush.bf16.msra.mxu0 %v1144
  %1787 = vmatmul.bf16.gmra.mxu0 %v1764
  %v1788 = vpop.f32.mrf.mxu0
  %v1789 = vadd.f32 0.0, %v1788
  %v1790 = vpop.f32.mrf.mxu0
  %1791 = vdwg.mxu0
  %v1792 = vadd.f32 %v1757, %v1776
  %v1793 = vadd.f32 %v1758, %v1789
  %v1794 = vxor.u32 %v1792, 2147483648
  %v1795 = vmul.f32 %v1794, 1.442695
  %v1796 = vpow.pop %v1795
  %v1797 = vadd.f32 %v1796, 1.0
  %v1798 = vrcp.pop %v1797
  %v1799 = vmul.f32 %v1797, %v1798
  %v1800 = vsub.f32 1.0, %v1799
  %v1801 = vmul.f32 %v1798, %v1800
  %v1802 = vadd.f32 %v1798, %v1801
  %vm1803 = vweird.f32 %v1797
  %vm1804 = vweird.f32 %v1798
  %vm1805 = vmor %vm1803, %vm1804
  %v1806 = vsel %vm1805, %v1798, %v1802
  %v1807 = vand.u32 2147483647, %v1797
  %vm1808 = vcmp.eq.f32.partialorder %v1807, 8.507059e+37
  %v1809 = vand.u32 %v1797, 2147483648
  %v1810 = vor.u32 1.1754944e-38, %v1809
  %v1811 = vsel %vm1808, %v1810, %v1806
  %v1812 = vmul.f32 1.0, %v1811
  %v1813 = vtanh.pop %v1793
  %v1814 = vxor.u32 %v1793, 2147483648
  %v1815 = vmul.f32 %v1814, 1.442695
  %v1816 = vpow.pop %v1815
  %v1817 = vadd.f32 %v1816, 1.0
  %v1818 = vrcp.pop %v1817
  %v1819 = vmul.f32 %v1817, %v1818
  %v1820 = vsub.f32 1.0, %v1819
  %v1821 = vmul.f32 %v1818, %v1820
  %v1822 = vadd.f32 %v1818, %v1821
  %vm1823 = vweird.f32 %v1817
  %vm1824 = vweird.f32 %v1818
  %vm1825 = vmor %vm1823, %vm1824
  %v1826 = vsel %vm1825, %v1818, %v1822
  %v1827 = vand.u32 2147483647, %v1817
  %vm1828 = vcmp.eq.f32.partialorder %v1827, 8.507059e+37
  %v1829 = vand.u32 %v1817, 2147483648
  %v1830 = vor.u32 1.1754944e-38, %v1829
  %v1831 = vsel %vm1828, %v1830, %v1826
  %v1832 = vmul.f32 1.0, %v1831
  %v1833 = vmul.f32 %v1812, %v1754
  %v1834 = vmul.f32 %v1812, %v1813
  %1836 = vrot.lane.b32.xlu0 %v1834, 64
  %v1837 = vpop.permute.xlu0 %1836
  %v1839 = vadd.f32 %v1833, %v1837
  %v1840 = vtanh.pop %v1839
  %v1841 = vmul.f32 %v1832, %v1840
  %1843 = vrot.lane.b32.xlu0 %v1841, 64
  %v1844 = vpop.permute.xlu0 %1843
  %1847 = vrot.lane.b32.xlu0 %v1234, 64
  %v1848 = vpop.permute.xlu0 %1847
  %v1850 = vsel %vm62, %v1844, %v1848
  %v1851 = vpack.c.bf16 %v1850, %v1850
  %v1852 = vld [vmem:[%s7] sm:$0xf]
  %v1853 = vld [vmem:[%s7 + $0x4] sm:$0xf]
  %v1854 = vld [vmem:[%s7 + $0x8] sm:$0xf]
  %v1855 = vld [vmem:[%s7 + $0xc] sm:$0xf]
  %v1856 = vld [vmem:[%s7 + $0x10] sm:$0xf]
  %v1857 = vld [vmem:[%s7 + $0x14] sm:$0xf]
  %v1858 = vld [vmem:[%s7 + $0x18] sm:$0xf]
  %v1859 = vld [vmem:[%s7 + $0x1c] sm:$0xf]
  %v1860 = vld [vmem:[%s8] sm:$0x1]
  %v1862 = vperm.slane %v1860, 0
  %v1872 = vunpack.c.l.b16 %v1852
  %v1873 = vunpack.c.l.b16 %v1853
  %v1874 = vunpack.c.l.b16 %v1854
  %v1875 = vunpack.c.l.b16 %v1855
  %v1876 = vunpack.c.l.b16 %v1856
  %v1877 = vunpack.c.l.b16 %v1857
  %v1878 = vunpack.c.l.b16 %v1858
  %v1879 = vunpack.c.l.b16 %v1859
  %v1880 = vpack.c.b16 %v1873, %v1872
  %v1881 = vpack.c.b16 %v1875, %v1874
  %v1882 = vpack.c.b16 %v1877, %v1876
  %v1883 = vpack.c.b16 %v1879, %v1878
  %v1889 = vsel %vm234, %v1851, 0
  %1891 = vmatpush.bf16.msra.mxu0 0
  %1892 = vmatpush.bf16.msra.mxu0 0
  %1893 = vmatpush.bf16.msra.mxu0 0
  %1894 = vmatpush.bf16.msra.mxu0 0
  %1895 = vmatpush.bf16.msra.mxu0 %v1883
  %1896 = vmatpush.bf16.msra.mxu0 %v1882
  %1897 = vmatpush.bf16.msra.mxu0 %v1881
  %1898 = vmatpush.bf16.msra.mxu0 %v1880
  %1899 = vmatmul.bf16.gmra.mxu0 %v1889
  %v1900 = vpop.f32.mrf.mxu0
  %v1901 = vadd.f32 %v1862, %v1900
  %v1902 = vpop.f32.mrf.mxu0
  %1903 = vdwg.mxu0
  %vm1904 = vcmask 80896
  %1905 = vst.msk [vmem:[%s9] sm:$0xff] %vm1904, %v1901
  // Predicated region
  $region38: #{lstm_model_forward.1} parent=0 // pred_check
    _
  $region39: #{lstm_model_forward.1} parent=0 // pred_check_branch
    %1907 = sbr.rel (0) target = $region41
  $region40: #{lstm_model_forward.1} parent=0 // pred_region
    _
  $region41: #{lstm_model_forward.1} parent=0 // pred_fallthru
    _
  // Predicated region
  $region42: #{lstm_model_forward.1} parent=0 // pred_check
    _
  $region43: #{lstm_model_forward.1} parent=0 // pred_check_branch
    %1909 = sbr.rel (0) target = $region45
  $region44: #{lstm_model_forward.1} parent=0 // pred_region
    _
  $region45: #{lstm_model_forward.1} parent=0 // pred_fallthru
    _

</llo_original>
